<compile_context>
chip_gen: v5e
topology: v5e:2x2
jax: 0.10.0
libtpu: 0.0.40
codegen_flags: <defaults>
</compile_context>

<pallas_src>
import functools

import jax
import jax.numpy as jnp
from jax.experimental import pallas as pl
from jax.experimental.pallas import tpu as pltpu

LANE = 128
_BF16 = jnp.bfloat16


# ----------------------------- fused Pallas kernel --------------------------

def _fused_gnn_kernel(num_layers, *refs):
    """Entire CombinedGNNModel forward in one kernel; intermediates in VMEM."""
    *in_refs, o_ref = refs
    it = iter(in_refs)

    def nxt():
        return next(it)[...]

    f32 = jnp.float32

    a_gcn = nxt()        # (N, N)    bf16   D^-1/2 (A+I) D^-1/2
    a_mean = nxt()       # (N, N)    bf16   row-normalized A (mean aggregation)
    pool = nxt()         # (Gp, N)   bf16   global_mean_pool matrix (padded rows)
    x_in = nxt()         # (N, Cin)  bf16
    w_in = nxt()         # (Cin, H)  bf16
    b_in = nxt()         # (1, H)    f32

    # x = relu(input_proj(x))
    h = jnp.dot(x_in, w_in, preferred_element_type=f32) + b_in
    x0 = jnp.maximum(h, 0.0).astype(_BF16)

    # ---- GCN branch: relu(bn(A_hat @ (X W) + b)), bias folded into shift ----
    xg = x0
    for _ in range(num_layers):
        w = nxt(); scale = nxt(); shift = nxt()
        h = jnp.dot(xg, w, preferred_element_type=f32).astype(_BF16)
        h = jnp.dot(a_gcn, h, preferred_element_type=f32)
        xg = jnp.maximum(h * scale + shift, 0.0).astype(_BF16)

    # ---- SAGE branch: relu(bn((A_mean @ X) W_l + b_l + X W_r)) ----
    xs = x0
    for _ in range(num_layers):
        wl = nxt(); wr = nxt(); scale = nxt(); shift = nxt()
        agg = jnp.dot(a_mean, xs, preferred_element_type=f32).astype(_BF16)
        h = (jnp.dot(agg, wl, preferred_element_type=f32)
             + jnp.dot(xs, wr, preferred_element_type=f32))
        xs = jnp.maximum(h * scale + shift, 0.0).astype(_BF16)

    # ---- global mean pooling (matmul with pooling matrix) ----
    pg = jnp.dot(pool, xg, preferred_element_type=f32).astype(_BF16)   # (Gp, out)
    ps = jnp.dot(pool, xs, preferred_element_type=f32).astype(_BF16)   # (Gp, out)

    # ---- MLP head: concat([pg, ps]) @ W1 == pg @ W1_top + ps @ W1_bot ----
    w1g = nxt(); w1s = nxt(); scale1 = nxt(); shift1 = nxt()
    h = (jnp.dot(pg, w1g, preferred_element_type=f32)
         + jnp.dot(ps, w1s, preferred_element_type=f32))
    h = jnp.maximum(h * scale1 + shift1, 0.0).astype(_BF16)

    w2 = nxt(); scale2 = nxt(); shift2 = nxt()
    h = jnp.dot(h, w2, preferred_element_type=f32)
    h = jnp.maximum(h * scale2 + shift2, 0.0).astype(_BF16)

    w3 = nxt(); b3 = nxt()             # (h2, LANE) zero-padded / (1, LANE)
    out = jnp.dot(h, w3, preferred_element_type=f32) + b3
    o_ref[...] = out                   # (Gp, LANE) f32 — lane-dense, unmasked store


# ----------------------------- pallas_call glue -----------------------------

def _full_spec(shape):
    n = len(shape)
    return pl.BlockSpec(shape, lambda i, _n=n: (0,) * _n)


def _fused_forward_call(num_layers, out_shape, arrays):
    return pl.pallas_call(
        functools.partial(_fused_gnn_kernel, num_layers),
        out_shape=jax.ShapeDtypeStruct(out_shape, jnp.float32),
        grid=(1,),
        in_specs=[_full_spec(a.shape) for a in arrays],
        out_specs=_full_spec(out_shape),
        compiler_params=pltpu.CompilerParams(
            dimension_semantics=("arbitrary",)),
    )(*arrays)


# ----------------------------- parameter init -------------------------------

def init_params(key, in_channels, hidden_channels, out_channels, num_layers=2):
    keys = iter(jax.random.split(key, 128))

    def lin(i, o):
        return {
            "w": 0.1 * jax.random.normal(next(keys), (i, o), jnp.float32),
            "b": (0.1 * jax.random.normal(next(keys), (o,), jnp.float32)).reshape(1, o),
        }

    def bn(c):
        gamma = 1.0 + 0.1 * jax.random.normal(next(keys), (c,), jnp.float32)
        beta = 0.1 * jax.random.normal(next(keys), (c,), jnp.float32)
        running_mean = 0.1 * jax.random.normal(next(keys), (c,), jnp.float32)
        running_var = 1.0 + 0.1 * jnp.abs(jax.random.normal(next(keys), (c,), jnp.float32))
        eps = 1e-5
        scale = gamma / jnp.sqrt(running_var + eps)
        shift = beta - running_mean * scale
        return {"scale": scale.reshape(1, c), "shift": shift.reshape(1, c)}

    dims = [(hidden_channels, hidden_channels)] * (num_layers - 1) + \
           [(hidden_channels, out_channels)]

    params = {
        "input_proj": lin(in_channels, hidden_channels),
        "gcn": [], "gcn_bn": [], "sage": [], "sage_bn": [],
    }
    for (ci, co) in dims:
        params["gcn"].append(lin(ci, co))
        params["gcn_bn"].append(bn(co))
        sl = lin(ci, co)   # lin_l (aggregated neighbors), has bias
        wr = 0.1 * jax.random.normal(next(keys), (ci, co), jnp.float32)  # lin_r, no bias
        params["sage"].append({"wl": sl["w"], "bl": sl["b"], "wr": wr})
        params["sage_bn"].append(bn(co))

    params["fc1"] = lin(out_channels * 2, hidden_channels)
    params["bn_fc1"] = bn(hidden_channels)
    params["fc2"] = lin(hidden_channels, hidden_channels // 2)
    params["bn_fc2"] = bn(hidden_channels // 2)
    params["fc3"] = lin(hidden_channels // 2, 1)
    return params


# ----------------------------- graph operators -------------------------------

def build_operators(edge_index, num_nodes, batch, num_graphs):
    src, dst = edge_index[0], edge_index[1]
    adj = jnp.zeros((num_nodes, num_nodes), jnp.float32).at[dst, src].add(1.0)

    # GCN: D^{-1/2} (A + I) D^{-1/2}
    adj_sl = adj + jnp.eye(num_nodes, dtype=jnp.float32)
    deg = adj_sl.sum(axis=1)
    dis = jnp.where(deg > 0, 1.0 / jnp.sqrt(deg), 0.0)
    a_gcn = dis[:, None] * adj_sl * dis[None, :]

    # SAGE mean aggregation over incoming neighbors (no self loops).
    deg_in = adj.sum(axis=1)
    inv = jnp.where(deg_in > 0, 1.0 / deg_in, 0.0)
    a_mean = adj * inv[:, None]

    # global_mean_pool
    one_hot = (batch[None, :] == jnp.arange(num_graphs)[:, None]).astype(jnp.float32)
    counts = one_hot.sum(axis=1, keepdims=True)
    pool_mat = one_hot / jnp.maximum(counts, 1.0)
    return a_gcn, a_mean, pool_mat


# ----------------------------- input flattening -------------------------------

def build_kernel_inputs(params, x, a_gcn, a_mean, pool_mat, num_layers):
    """Flatten params into the kernel's arg order; fold biases, cast bf16, pad."""
    num_graphs, n = pool_mat.shape
    g_pad = max(8, ((num_graphs + 7) // 8) * 8)
    pool_pad = jnp.zeros((g_pad, n), jnp.float32).at[:num_graphs].set(pool_mat)

    arrays = [
        a_gcn.astype(_BF16),
        a_mean.astype(_BF16),
        pool_pad.astype(_BF16),
        x.astype(_BF16),
        params["input_proj"]["w"].astype(_BF16),
        params["input_proj"]["b"].astype(jnp.float32),
    ]

    def folded(bn_p, bias):
        scale = bn_p["scale"].astype(jnp.float32)
        shift = (bn_p["shift"] + bias * bn_p["scale"]).astype(jnp.float32)
        return scale, shift

    for i in range(num_layers):
        p, bn_p = params["gcn"][i], params["gcn_bn"][i]
        scale, shift = folded(bn_p, p["b"])
        arrays += [p["w"].astype(_BF16), scale, shift]

    for i in range(num_layers):
        p, bn_p = params["sage"][i], params["sage_bn"][i]
        scale, shift = folded(bn_p, p["bl"])
        arrays += [p["wl"].astype(_BF16), p["wr"].astype(_BF16), scale, shift]

    out_ch = params["gcn"][-1]["w"].shape[1]
    w1 = params["fc1"]["w"]                       # (2*out, H)
    s1, sh1 = folded(params["bn_fc1"], params["fc1"]["b"])
    arrays += [w1[:out_ch].astype(_BF16), w1[out_ch:].astype(_BF16), s1, sh1]

    s2, sh2 = folded(params["bn_fc2"], params["fc2"]["b"])
    arrays += [params["fc2"]["w"].astype(_BF16), s2, sh2]

    w3 = params["fc3"]["w"]                       # (h2, 1)
    b3 = params["fc3"]["b"]                       # (1, 1)
    h2 = w3.shape[0]
    w3_pad = jnp.zeros((h2, LANE), jnp.float32).at[:, :1].set(w3).astype(_BF16)
    b3_pad = jnp.zeros((1, LANE), jnp.float32).at[:, :1].set(b3)
    arrays += [w3_pad, b3_pad]

    return arrays, g_pad, num_graphs


# ----------------------------- forward pass -----------------------------------

def combined_gnn_forward(params, x, a_gcn, a_mean, pool_mat, num_layers=2):
    arrays, g_pad, num_graphs = build_kernel_inputs(
        params, x, a_gcn, a_mean, pool_mat, num_layers)
    out = _fused_forward_call(num_layers, (g_pad, LANE), arrays)
    return out[:num_graphs, 0]


# ----------------------------------- main --------------------------------------

if __name__ == "__main__":
    key = jax.random.PRNGKey(0)
    k_param, k_x = jax.random.split(key)

    in_channels, hidden_channels, out_channels = 16, 32, 32
    num_layers = 2
    nodes_per_graph, num_graphs = 12, 2
    num_nodes = nodes_per_graph * num_graphs

    # deterministic node features
    x = jax.random.normal(k_x, (num_nodes, in_channels), jnp.float32)

    # two undirected ring graphs
    def ring_edges(n, offset):
        s = jnp.arange(n) + offset
        d = (jnp.arange(n) + 1) % n + offset
        return jnp.stack([jnp.concatenate([s, d]), jnp.concatenate([d, s])])

    edge_index = jnp.concatenate(
        [ring_edges(nodes_per_graph, 0), ring_edges(nodes_per_graph, nodes_per_graph)],
        axis=1).astype(jnp.int32)
    batch = jnp.concatenate(
        [jnp.zeros((nodes_per_graph,), jnp.int32),
         jnp.ones((nodes_per_graph,), jnp.int32)])

    params = init_params(k_param, in_channels, hidden_channels, out_channels,
                         num_layers=num_layers)
    a_gcn, a_mean, pool_mat = build_operators(edge_index, num_nodes, batch, num_graphs)

    out = combined_gnn_forward(params, x, a_gcn, a_mean, pool_mat,
                               num_layers=num_layers)
    out = jax.block_until_ready(out)
    assert out.shape == (num_graphs,), out.shape
    print("KERNEL_OK")
</pallas_src>

<mosaic_0001>
module attributes {stable_mosaic.version = 11 : i64} {
  func.func @_fused_gnn_kernel(%arg0: i32, %arg1: memref<24x24xbf16, #tpu.memory_space<vmem>>, %arg2: memref<24x24xbf16, #tpu.memory_space<vmem>>, %arg3: memref<8x24xbf16, #tpu.memory_space<vmem>>, %arg4: memref<24x16xbf16, #tpu.memory_space<vmem>>, %arg5: memref<16x32xbf16, #tpu.memory_space<vmem>>, %arg6: memref<1x32xf32, #tpu.memory_space<vmem>>, %arg7: memref<32x32xbf16, #tpu.memory_space<vmem>>, %arg8: memref<1x32xf32, #tpu.memory_space<vmem>>, %arg9: memref<1x32xf32, #tpu.memory_space<vmem>>, %arg10: memref<32x32xbf16, #tpu.memory_space<vmem>>, %arg11: memref<1x32xf32, #tpu.memory_space<vmem>>, %arg12: memref<1x32xf32, #tpu.memory_space<vmem>>, %arg13: memref<32x32xbf16, #tpu.memory_space<vmem>>, %arg14: memref<32x32xbf16, #tpu.memory_space<vmem>>, %arg15: memref<1x32xf32, #tpu.memory_space<vmem>>, %arg16: memref<1x32xf32, #tpu.memory_space<vmem>>, %arg17: memref<32x32xbf16, #tpu.memory_space<vmem>>, %arg18: memref<32x32xbf16, #tpu.memory_space<vmem>>, %arg19: memref<1x32xf32, #tpu.memory_space<vmem>>, %arg20: memref<1x32xf32, #tpu.memory_space<vmem>>, %arg21: memref<32x32xbf16, #tpu.memory_space<vmem>>, %arg22: memref<32x32xbf16, #tpu.memory_space<vmem>>, %arg23: memref<1x32xf32, #tpu.memory_space<vmem>>, %arg24: memref<1x32xf32, #tpu.memory_space<vmem>>, %arg25: memref<32x16xbf16, #tpu.memory_space<vmem>>, %arg26: memref<1x16xf32, #tpu.memory_space<vmem>>, %arg27: memref<1x16xf32, #tpu.memory_space<vmem>>, %arg28: memref<16x128xbf16, #tpu.memory_space<vmem>>, %arg29: memref<1x128xf32, #tpu.memory_space<vmem>>, %arg30: memref<8x128xf32, #tpu.memory_space<vmem>>) attributes {dimension_semantics = [#tpu.dimension_semantics<arbitrary>], iteration_bounds = array<i64: 1>, scalar_prefetch = 0 : i64, scratch_operands = 0 : i64, tpu.core_type = #tpu.core_type<tc>, window_params = [{pipeline_mode = #tpu.pipeline_mode<synchronous>, transform_indices = @transform_0, window_bounds = array<i64: 24, 24>}, {pipeline_mode = #tpu.pipeline_mode<synchronous>, transform_indices = @transform_1, window_bounds = array<i64: 24, 24>}, {pipeline_mode = #tpu.pipeline_mode<synchronous>, transform_indices = @transform_2, window_bounds = array<i64: 8, 24>}, {pipeline_mode = #tpu.pipeline_mode<synchronous>, transform_indices = @transform_3, window_bounds = array<i64: 24, 16>}, {pipeline_mode = #tpu.pipeline_mode<synchronous>, transform_indices = @transform_4, window_bounds = array<i64: 16, 32>}, {pipeline_mode = #tpu.pipeline_mode<synchronous>, transform_indices = @transform_5, window_bounds = array<i64: 1, 32>}, {pipeline_mode = #tpu.pipeline_mode<synchronous>, transform_indices = @transform_6, window_bounds = array<i64: 32, 32>}, {pipeline_mode = #tpu.pipeline_mode<synchronous>, transform_indices = @transform_7, window_bounds = array<i64: 1, 32>}, {pipeline_mode = #tpu.pipeline_mode<synchronous>, transform_indices = @transform_8, window_bounds = array<i64: 1, 32>}, {pipeline_mode = #tpu.pipeline_mode<synchronous>, transform_indices = @transform_9, window_bounds = array<i64: 32, 32>}, {pipeline_mode = #tpu.pipeline_mode<synchronous>, transform_indices = @transform_10, window_bounds = array<i64: 1, 32>}, {pipeline_mode = #tpu.pipeline_mode<synchronous>, transform_indices = @transform_11, window_bounds = array<i64: 1, 32>}, {pipeline_mode = #tpu.pipeline_mode<synchronous>, transform_indices = @transform_12, window_bounds = array<i64: 32, 32>}, {pipeline_mode = #tpu.pipeline_mode<synchronous>, transform_indices = @transform_13, window_bounds = array<i64: 32, 32>}, {pipeline_mode = #tpu.pipeline_mode<synchronous>, transform_indices = @transform_14, window_bounds = array<i64: 1, 32>}, {pipeline_mode = #tpu.pipeline_mode<synchronous>, transform_indices = @transform_15, window_bounds = array<i64: 1, 32>}, {pipeline_mode = #tpu.pipeline_mode<synchronous>, transform_indices = @transform_16, window_bounds = array<i64: 32, 32>}, {pipeline_mode = #tpu.pipeline_mode<synchronous>, transform_indices = @transform_17, window_bounds = array<i64: 32, 32>}, {pipeline_mode = #tpu.pipeline_mode<synchronous>, transform_indices = @transform_18, window_bounds = array<i64: 1, 32>}, {pipeline_mode = #tpu.pipeline_mode<synchronous>, transform_indices = @transform_19, window_bounds = array<i64: 1, 32>}, {pipeline_mode = #tpu.pipeline_mode<synchronous>, transform_indices = @transform_20, window_bounds = array<i64: 32, 32>}, {pipeline_mode = #tpu.pipeline_mode<synchronous>, transform_indices = @transform_21, window_bounds = array<i64: 32, 32>}, {pipeline_mode = #tpu.pipeline_mode<synchronous>, transform_indices = @transform_22, window_bounds = array<i64: 1, 32>}, {pipeline_mode = #tpu.pipeline_mode<synchronous>, transform_indices = @transform_23, window_bounds = array<i64: 1, 32>}, {pipeline_mode = #tpu.pipeline_mode<synchronous>, transform_indices = @transform_24, window_bounds = array<i64: 32, 16>}, {pipeline_mode = #tpu.pipeline_mode<synchronous>, transform_indices = @transform_25, window_bounds = array<i64: 1, 16>}, {pipeline_mode = #tpu.pipeline_mode<synchronous>, transform_indices = @transform_26, window_bounds = array<i64: 1, 16>}, {pipeline_mode = #tpu.pipeline_mode<synchronous>, transform_indices = @transform_27, window_bounds = array<i64: 16, 128>}, {pipeline_mode = #tpu.pipeline_mode<synchronous>, transform_indices = @transform_28, window_bounds = array<i64: 1, 128>}, {pipeline_mode = #tpu.pipeline_mode<synchronous>, transform_indices = @transform_29, window_bounds = array<i64: 8, 128>}]} {
    %c0 = arith.constant 0 : index
    %c0_0 = arith.constant 0 : index
    %0 = vector.load %arg1[%c0, %c0_0] : memref<24x24xbf16, #tpu.memory_space<vmem>>, vector<24x24xbf16>
    %c0_1 = arith.constant 0 : index
    %c0_2 = arith.constant 0 : index
    %1 = vector.load %arg2[%c0_1, %c0_2] : memref<24x24xbf16, #tpu.memory_space<vmem>>, vector<24x24xbf16>
    %c0_3 = arith.constant 0 : index
    %c0_4 = arith.constant 0 : index
    %2 = vector.load %arg3[%c0_3, %c0_4] : memref<8x24xbf16, #tpu.memory_space<vmem>>, vector<8x24xbf16>
    %c0_5 = arith.constant 0 : index
    %c0_6 = arith.constant 0 : index
    %3 = vector.load %arg4[%c0_5, %c0_6] : memref<24x16xbf16, #tpu.memory_space<vmem>>, vector<24x16xbf16>
    %c0_7 = arith.constant 0 : index
    %c0_8 = arith.constant 0 : index
    %4 = vector.load %arg5[%c0_7, %c0_8] : memref<16x32xbf16, #tpu.memory_space<vmem>>, vector<16x32xbf16>
    %c0_9 = arith.constant 0 : index
    %c0_10 = arith.constant 0 : index
    %5 = vector.load %arg6[%c0_9, %c0_10] : memref<1x32xf32, #tpu.memory_space<vmem>>, vector<1x32xf32>
    %cst = arith.constant dense<0.000000e+00> : vector<24x32xf32>
    %6 = tpu.matmul %3, %4, %cst {dimension_numbers = #tpu.dot_dimension_numbers<[1], [0], [0], [1], [0, 0, 1, 1], [], []>} : vector<24x16xbf16>, vector<16x32xbf16>, vector<24x32xf32> -> vector<24x32xf32>
    %7 = vector.broadcast %5 : vector<1x32xf32> to vector<24x32xf32>
    %8 = arith.addf %6, %7 : vector<24x32xf32>
    %cst_11 = arith.constant 0.000000e+00 : f32
    %9 = vector.broadcast %cst_11 : f32 to vector<24x32xf32>
    %10 = arith.maximumf %8, %9 : vector<24x32xf32>
    %11 = arith.truncf %10 : vector<24x32xf32> to vector<24x32xbf16>
    %c0_12 = arith.constant 0 : index
    %c0_13 = arith.constant 0 : index
    %12 = vector.load %arg7[%c0_12, %c0_13] : memref<32x32xbf16, #tpu.memory_space<vmem>>, vector<32x32xbf16>
    %c0_14 = arith.constant 0 : index
    %c0_15 = arith.constant 0 : index
    %13 = vector.load %arg8[%c0_14, %c0_15] : memref<1x32xf32, #tpu.memory_space<vmem>>, vector<1x32xf32>
    %c0_16 = arith.constant 0 : index
    %c0_17 = arith.constant 0 : index
    %14 = vector.load %arg9[%c0_16, %c0_17] : memref<1x32xf32, #tpu.memory_space<vmem>>, vector<1x32xf32>
    %cst_18 = arith.constant dense<0.000000e+00> : vector<24x32xf32>
    %15 = tpu.matmul %11, %12, %cst_18 {dimension_numbers = #tpu.dot_dimension_numbers<[1], [0], [0], [1], [0, 0, 1, 1], [], []>} : vector<24x32xbf16>, vector<32x32xbf16>, vector<24x32xf32> -> vector<24x32xf32>
    %16 = arith.truncf %15 : vector<24x32xf32> to vector<24x32xbf16>
    %cst_19 = arith.constant dense<0.000000e+00> : vector<24x32xf32>
    %17 = tpu.matmul %0, %16, %cst_19 {dimension_numbers = #tpu.dot_dimension_numbers<[1], [0], [0], [1], [0, 0, 1, 1], [], []>} : vector<24x24xbf16>, vector<24x32xbf16>, vector<24x32xf32> -> vector<24x32xf32>
    %18 = vector.broadcast %13 : vector<1x32xf32> to vector<24x32xf32>
    %19 = arith.mulf %17, %18 : vector<24x32xf32>
    %20 = vector.broadcast %14 : vector<1x32xf32> to vector<24x32xf32>
    %21 = arith.addf %19, %20 : vector<24x32xf32>
    %cst_20 = arith.constant 0.000000e+00 : f32
    %22 = vector.broadcast %cst_20 : f32 to vector<24x32xf32>
    %23 = arith.maximumf %21, %22 : vector<24x32xf32>
    %24 = arith.truncf %23 : vector<24x32xf32> to vector<24x32xbf16>
    %c0_21 = arith.constant 0 : index
    %c0_22 = arith.constant 0 : index
    %25 = vector.load %arg10[%c0_21, %c0_22] : memref<32x32xbf16, #tpu.memory_space<vmem>>, vector<32x32xbf16>
    %c0_23 = arith.constant 0 : index
    %c0_24 = arith.constant 0 : index
    %26 = vector.load %arg11[%c0_23, %c0_24] : memref<1x32xf32, #tpu.memory_space<vmem>>, vector<1x32xf32>
    %c0_25 = arith.constant 0 : index
    %c0_26 = arith.constant 0 : index
    %27 = vector.load %arg12[%c0_25, %c0_26] : memref<1x32xf32, #tpu.memory_space<vmem>>, vector<1x32xf32>
    %cst_27 = arith.constant dense<0.000000e+00> : vector<24x32xf32>
    %28 = tpu.matmul %24, %25, %cst_27 {dimension_numbers = #tpu.dot_dimension_numbers<[1], [0], [0], [1], [0, 0, 1, 1], [], []>} : vector<24x32xbf16>, vector<32x32xbf16>, vector<24x32xf32> -> vector<24x32xf32>
    %29 = arith.truncf %28 : vector<24x32xf32> to vector<24x32xbf16>
    %cst_28 = arith.constant dense<0.000000e+00> : vector<24x32xf32>
    %30 = tpu.matmul %0, %29, %cst_28 {dimension_numbers = #tpu.dot_dimension_numbers<[1], [0], [0], [1], [0, 0, 1, 1], [], []>} : vector<24x24xbf16>, vector<24x32xbf16>, vector<24x32xf32> -> vector<24x32xf32>
    %31 = vector.broadcast %26 : vector<1x32xf32> to vector<24x32xf32>
    %32 = arith.mulf %30, %31 : vector<24x32xf32>
    %33 = vector.broadcast %27 : vector<1x32xf32> to vector<24x32xf32>
    %34 = arith.addf %32, %33 : vector<24x32xf32>
    %cst_29 = arith.constant 0.000000e+00 : f32
    %35 = vector.broadcast %cst_29 : f32 to vector<24x32xf32>
    %36 = arith.maximumf %34, %35 : vector<24x32xf32>
    %37 = arith.truncf %36 : vector<24x32xf32> to vector<24x32xbf16>
    %c0_30 = arith.constant 0 : index
    %c0_31 = arith.constant 0 : index
    %38 = vector.load %arg13[%c0_30, %c0_31] : memref<32x32xbf16, #tpu.memory_space<vmem>>, vector<32x32xbf16>
    %c0_32 = arith.constant 0 : index
    %c0_33 = arith.constant 0 : index
    %39 = vector.load %arg14[%c0_32, %c0_33] : memref<32x32xbf16, #tpu.memory_space<vmem>>, vector<32x32xbf16>
    %c0_34 = arith.constant 0 : index
    %c0_35 = arith.constant 0 : index
    %40 = vector.load %arg15[%c0_34, %c0_35] : memref<1x32xf32, #tpu.memory_space<vmem>>, vector<1x32xf32>
    %c0_36 = arith.constant 0 : index
    %c0_37 = arith.constant 0 : index
    %41 = vector.load %arg16[%c0_36, %c0_37] : memref<1x32xf32, #tpu.memory_space<vmem>>, vector<1x32xf32>
    %cst_38 = arith.constant dense<0.000000e+00> : vector<24x32xf32>
    %42 = tpu.matmul %1, %11, %cst_38 {dimension_numbers = #tpu.dot_dimension_numbers<[1], [0], [0], [1], [0, 0, 1, 1], [], []>} : vector<24x24xbf16>, vector<24x32xbf16>, vector<24x32xf32> -> vector<24x32xf32>
    %43 = arith.truncf %42 : vector<24x32xf32> to vector<24x32xbf16>
    %cst_39 = arith.constant dense<0.000000e+00> : vector<24x32xf32>
    %44 = tpu.matmul %43, %38, %cst_39 {dimension_numbers = #tpu.dot_dimension_numbers<[1], [0], [0], [1], [0, 0, 1, 1], [], []>} : vector<24x32xbf16>, vector<32x32xbf16>, vector<24x32xf32> -> vector<24x32xf32>
    %cst_40 = arith.constant dense<0.000000e+00> : vector<24x32xf32>
    %45 = tpu.matmul %11, %39, %cst_40 {dimension_numbers = #tpu.dot_dimension_numbers<[1], [0], [0], [1], [0, 0, 1, 1], [], []>} : vector<24x32xbf16>, vector<32x32xbf16>, vector<24x32xf32> -> vector<24x32xf32>
    %46 = arith.addf %44, %45 : vector<24x32xf32>
    %47 = vector.broadcast %40 : vector<1x32xf32> to vector<24x32xf32>
    %48 = arith.mulf %46, %47 : vector<24x32xf32>
    %49 = vector.broadcast %41 : vector<1x32xf32> to vector<24x32xf32>
    %50 = arith.addf %48, %49 : vector<24x32xf32>
    %cst_41 = arith.constant 0.000000e+00 : f32
    %51 = vector.broadcast %cst_41 : f32 to vector<24x32xf32>
    %52 = arith.maximumf %50, %51 : vector<24x32xf32>
    %53 = arith.truncf %52 : vector<24x32xf32> to vector<24x32xbf16>
    %c0_42 = arith.constant 0 : index
    %c0_43 = arith.constant 0 : index
    %54 = vector.load %arg17[%c0_42, %c0_43] : memref<32x32xbf16, #tpu.memory_space<vmem>>, vector<32x32xbf16>
    %c0_44 = arith.constant 0 : index
    %c0_45 = arith.constant 0 : index
    %55 = vector.load %arg18[%c0_44, %c0_45] : memref<32x32xbf16, #tpu.memory_space<vmem>>, vector<32x32xbf16>
    %c0_46 = arith.constant 0 : index
    %c0_47 = arith.constant 0 : index
    %56 = vector.load %arg19[%c0_46, %c0_47] : memref<1x32xf32, #tpu.memory_space<vmem>>, vector<1x32xf32>
    %c0_48 = arith.constant 0 : index
    %c0_49 = arith.constant 0 : index
    %57 = vector.load %arg20[%c0_48, %c0_49] : memref<1x32xf32, #tpu.memory_space<vmem>>, vector<1x32xf32>
    %cst_50 = arith.constant dense<0.000000e+00> : vector<24x32xf32>
    %58 = tpu.matmul %1, %53, %cst_50 {dimension_numbers = #tpu.dot_dimension_numbers<[1], [0], [0], [1], [0, 0, 1, 1], [], []>} : vector<24x24xbf16>, vector<24x32xbf16>, vector<24x32xf32> -> vector<24x32xf32>
    %59 = arith.truncf %58 : vector<24x32xf32> to vector<24x32xbf16>
    %cst_51 = arith.constant dense<0.000000e+00> : vector<24x32xf32>
    %60 = tpu.matmul %59, %54, %cst_51 {dimension_numbers = #tpu.dot_dimension_numbers<[1], [0], [0], [1], [0, 0, 1, 1], [], []>} : vector<24x32xbf16>, vector<32x32xbf16>, vector<24x32xf32> -> vector<24x32xf32>
    %cst_52 = arith.constant dense<0.000000e+00> : vector<24x32xf32>
    %61 = tpu.matmul %53, %55, %cst_52 {dimension_numbers = #tpu.dot_dimension_numbers<[1], [0], [0], [1], [0, 0, 1, 1], [], []>} : vector<24x32xbf16>, vector<32x32xbf16>, vector<24x32xf32> -> vector<24x32xf32>
    %62 = arith.addf %60, %61 : vector<24x32xf32>
    %63 = vector.broadcast %56 : vector<1x32xf32> to vector<24x32xf32>
    %64 = arith.mulf %62, %63 : vector<24x32xf32>
    %65 = vector.broadcast %57 : vector<1x32xf32> to vector<24x32xf32>
    %66 = arith.addf %64, %65 : vector<24x32xf32>
    %cst_53 = arith.constant 0.000000e+00 : f32
    %67 = vector.broadcast %cst_53 : f32 to vector<24x32xf32>
    %68 = arith.maximumf %66, %67 : vector<24x32xf32>
    %69 = arith.truncf %68 : vector<24x32xf32> to vector<24x32xbf16>
    %cst_54 = arith.constant dense<0.000000e+00> : vector<8x32xf32>
    %70 = tpu.matmul %2, %37, %cst_54 {dimension_numbers = #tpu.dot_dimension_numbers<[1], [0], [0], [1], [0, 0, 1, 1], [], []>} : vector<8x24xbf16>, vector<24x32xbf16>, vector<8x32xf32> -> vector<8x32xf32>
    %71 = arith.truncf %70 : vector<8x32xf32> to vector<8x32xbf16>
    %cst_55 = arith.constant dense<0.000000e+00> : vector<8x32xf32>
    %72 = tpu.matmul %2, %69, %cst_55 {dimension_numbers = #tpu.dot_dimension_numbers<[1], [0], [0], [1], [0, 0, 1, 1], [], []>} : vector<8x24xbf16>, vector<24x32xbf16>, vector<8x32xf32> -> vector<8x32xf32>
    %73 = arith.truncf %72 : vector<8x32xf32> to vector<8x32xbf16>
    %c0_56 = arith.constant 0 : index
    %c0_57 = arith.constant 0 : index
    %74 = vector.load %arg21[%c0_56, %c0_57] : memref<32x32xbf16, #tpu.memory_space<vmem>>, vector<32x32xbf16>
    %c0_58 = arith.constant 0 : index
    %c0_59 = arith.constant 0 : index
    %75 = vector.load %arg22[%c0_58, %c0_59] : memref<32x32xbf16, #tpu.memory_space<vmem>>, vector<32x32xbf16>
    %c0_60 = arith.constant 0 : index
    %c0_61 = arith.constant 0 : index
    %76 = vector.load %arg23[%c0_60, %c0_61] : memref<1x32xf32, #tpu.memory_space<vmem>>, vector<1x32xf32>
    %c0_62 = arith.constant 0 : index
    %c0_63 = arith.constant 0 : index
    %77 = vector.load %arg24[%c0_62, %c0_63] : memref<1x32xf32, #tpu.memory_space<vmem>>, vector<1x32xf32>
    %cst_64 = arith.constant dense<0.000000e+00> : vector<8x32xf32>
    %78 = tpu.matmul %71, %74, %cst_64 {dimension_numbers = #tpu.dot_dimension_numbers<[1], [0], [0], [1], [0, 0, 1, 1], [], []>} : vector<8x32xbf16>, vector<32x32xbf16>, vector<8x32xf32> -> vector<8x32xf32>
    %cst_65 = arith.constant dense<0.000000e+00> : vector<8x32xf32>
    %79 = tpu.matmul %73, %75, %cst_65 {dimension_numbers = #tpu.dot_dimension_numbers<[1], [0], [0], [1], [0, 0, 1, 1], [], []>} : vector<8x32xbf16>, vector<32x32xbf16>, vector<8x32xf32> -> vector<8x32xf32>
    %80 = arith.addf %78, %79 : vector<8x32xf32>
    %81 = vector.broadcast %76 : vector<1x32xf32> to vector<8x32xf32>
    %82 = arith.mulf %80, %81 : vector<8x32xf32>
    %83 = vector.broadcast %77 : vector<1x32xf32> to vector<8x32xf32>
    %84 = arith.addf %82, %83 : vector<8x32xf32>
    %cst_66 = arith.constant 0.000000e+00 : f32
    %85 = vector.broadcast %cst_66 : f32 to vector<8x32xf32>
    %86 = arith.maximumf %84, %85 : vector<8x32xf32>
    %87 = arith.truncf %86 : vector<8x32xf32> to vector<8x32xbf16>
    %c0_67 = arith.constant 0 : index
    %c0_68 = arith.constant 0 : index
    %88 = vector.load %arg25[%c0_67, %c0_68] : memref<32x16xbf16, #tpu.memory_space<vmem>>, vector<32x16xbf16>
    %c0_69 = arith.constant 0 : index
    %c0_70 = arith.constant 0 : index
    %89 = vector.load %arg26[%c0_69, %c0_70] : memref<1x16xf32, #tpu.memory_space<vmem>>, vector<1x16xf32>
    %c0_71 = arith.constant 0 : index
    %c0_72 = arith.constant 0 : index
    %90 = vector.load %arg27[%c0_71, %c0_72] : memref<1x16xf32, #tpu.memory_space<vmem>>, vector<1x16xf32>
    %cst_73 = arith.constant dense<0.000000e+00> : vector<8x16xf32>
    %91 = tpu.matmul %87, %88, %cst_73 {dimension_numbers = #tpu.dot_dimension_numbers<[1], [0], [0], [1], [0, 0, 1, 1], [], []>} : vector<8x32xbf16>, vector<32x16xbf16>, vector<8x16xf32> -> vector<8x16xf32>
    %92 = vector.broadcast %89 : vector<1x16xf32> to vector<8x16xf32>
    %93 = arith.mulf %91, %92 : vector<8x16xf32>
    %94 = vector.broadcast %90 : vector<1x16xf32> to vector<8x16xf32>
    %95 = arith.addf %93, %94 : vector<8x16xf32>
    %cst_74 = arith.constant 0.000000e+00 : f32
    %96 = vector.broadcast %cst_74 : f32 to vector<8x16xf32>
    %97 = arith.maximumf %95, %96 : vector<8x16xf32>
    %98 = arith.truncf %97 : vector<8x16xf32> to vector<8x16xbf16>
    %c0_75 = arith.constant 0 : index
    %c0_76 = arith.constant 0 : index
    %99 = vector.load %arg28[%c0_75, %c0_76] : memref<16x128xbf16, #tpu.memory_space<vmem>>, vector<16x128xbf16>
    %c0_77 = arith.constant 0 : index
    %c0_78 = arith.constant 0 : index
    %100 = vector.load %arg29[%c0_77, %c0_78] : memref<1x128xf32, #tpu.memory_space<vmem>>, vector<1x128xf32>
    %cst_79 = arith.constant dense<0.000000e+00> : vector<8x128xf32>
    %101 = tpu.matmul %98, %99, %cst_79 {dimension_numbers = #tpu.dot_dimension_numbers<[1], [0], [0], [1], [0, 0, 1, 1], [], []>} : vector<8x16xbf16>, vector<16x128xbf16>, vector<8x128xf32> -> vector<8x128xf32>
    %102 = vector.broadcast %100 : vector<1x128xf32> to vector<8x128xf32>
    %103 = arith.addf %101, %102 : vector<8x128xf32>
    %c0_80 = arith.constant 0 : index
    %c0_81 = arith.constant 0 : index
    %104 = vector.load %arg30[%c0_80, %c0_81] : memref<8x128xf32, #tpu.memory_space<vmem>>, vector<8x128xf32>
    tpu.vector_store %arg30[%c0_80, %c0_81], %103 {strides = array<i32>} : memref<8x128xf32, #tpu.memory_space<vmem>>, vector<8x128xf32>,
    return
  }
  func.func @transform_0(%arg0: i32) -> (i32, i32) {
    %c0_i32 = arith.constant 0 : i32
    %c0_i32_0 = arith.constant 0 : i32
    %c0_i32_1 = arith.constant 0 : i32
    return %c0_i32, %c0_i32_0 : i32, i32
  }
  func.func @transform_1(%arg0: i32) -> (i32, i32) {
    %c0_i32 = arith.constant 0 : i32
    %c0_i32_0 = arith.constant 0 : i32
    %c0_i32_1 = arith.constant 0 : i32
    return %c0_i32, %c0_i32_0 : i32, i32
  }
  func.func @transform_2(%arg0: i32) -> (i32, i32) {
    %c0_i32 = arith.constant 0 : i32
    %c0_i32_0 = arith.constant 0 : i32
    %c0_i32_1 = arith.constant 0 : i32
    return %c0_i32, %c0_i32_0 : i32, i32
  }
  func.func @transform_3(%arg0: i32) -> (i32, i32) {
    %c0_i32 = arith.constant 0 : i32
    %c0_i32_0 = arith.constant 0 : i32
    %c0_i32_1 = arith.constant 0 : i32
    return %c0_i32, %c0_i32_0 : i32, i32
  }
  func.func @transform_4(%arg0: i32) -> (i32, i32) {
    %c0_i32 = arith.constant 0 : i32
    %c0_i32_0 = arith.constant 0 : i32
    %c0_i32_1 = arith.constant 0 : i32
    return %c0_i32, %c0_i32_0 : i32, i32
  }
  func.func @transform_5(%arg0: i32) -> (i32, i32) {
    %c0_i32 = arith.constant 0 : i32
    %c0_i32_0 = arith.constant 0 : i32
    %c0_i32_1 = arith.constant 0 : i32
    return %c0_i32, %c0_i32_0 : i32, i32
  }
  func.func @transform_6(%arg0: i32) -> (i32, i32) {
    %c0_i32 = arith.constant 0 : i32
    %c0_i32_0 = arith.constant 0 : i32
    %c0_i32_1 = arith.constant 0 : i32
    return %c0_i32, %c0_i32_0 : i32, i32
  }
  func.func @transform_7(%arg0: i32) -> (i32, i32) {
    %c0_i32 = arith.constant 0 : i32
    %c0_i32_0 = arith.constant 0 : i32
    %c0_i32_1 = arith.constant 0 : i32
    return %c0_i32, %c0_i32_0 : i32, i32
  }
  func.func @transform_8(%arg0: i32) -> (i32, i32) {
    %c0_i32 = arith.constant 0 : i32
    %c0_i32_0 = arith.constant 0 : i32
    %c0_i32_1 = arith.constant 0 : i32
    return %c0_i32, %c0_i32_0 : i32, i32
  }
  func.func @transform_9(%arg0: i32) -> (i32, i32) {
    %c0_i32 = arith.constant 0 : i32
    %c0_i32_0 = arith.constant 0 : i32
    %c0_i32_1 = arith.constant 0 : i32
    return %c0_i32, %c0_i32_0 : i32, i32
  }
  func.func @transform_10(%arg0: i32) -> (i32, i32) {
    %c0_i32 = arith.constant 0 : i32
    %c0_i32_0 = arith.constant 0 : i32
    %c0_i32_1 = arith.constant 0 : i32
    return %c0_i32, %c0_i32_0 : i32, i32
  }
  func.func @transform_11(%arg0: i32) -> (i32, i32) {
    %c0_i32 = arith.constant 0 : i32
    %c0_i32_0 = arith.constant 0 : i32
    %c0_i32_1 = arith.constant 0 : i32
    return %c0_i32, %c0_i32_0 : i32, i32
  }
  func.func @transform_12(%arg0: i32) -> (i32, i32) {
    %c0_i32 = arith.constant 0 : i32
    %c0_i32_0 = arith.constant 0 : i32
    %c0_i32_1 = arith.constant 0 : i32
    return %c0_i32, %c0_i32_0 : i32, i32
  }
  func.func @transform_13(%arg0: i32) -> (i32, i32) {
    %c0_i32 = arith.constant 0 : i32
    %c0_i32_0 = arith.constant 0 : i32
    %c0_i32_1 = arith.constant 0 : i32
    return %c0_i32, %c0_i32_0 : i32, i32
  }
  func.func @transform_14(%arg0: i32) -> (i32, i32) {
    %c0_i32 = arith.constant 0 : i32
    %c0_i32_0 = arith.constant 0 : i32
    %c0_i32_1 = arith.constant 0 : i32
    return %c0_i32, %c0_i32_0 : i32, i32
  }
  func.func @transform_15(%arg0: i32) -> (i32, i32) {
    %c0_i32 = arith.constant 0 : i32
    %c0_i32_0 = arith.constant 0 : i32
    %c0_i32_1 = arith.constant 0 : i32
    return %c0_i32, %c0_i32_0 : i32, i32
  }
  func.func @transform_16(%arg0: i32) -> (i32, i32) {
    %c0_i32 = arith.constant 0 : i32
    %c0_i32_0 = arith.constant 0 : i32
    %c0_i32_1 = arith.constant 0 : i32
    return %c0_i32, %c0_i32_0 : i32, i32
  }
  func.func @transform_17(%arg0: i32) -> (i32, i32) {
    %c0_i32 = arith.constant 0 : i32
    %c0_i32_0 = arith.constant 0 : i32
    %c0_i32_1 = arith.constant 0 : i32
    return %c0_i32, %c0_i32_0 : i32, i32
  }
  func.func @transform_18(%arg0: i32) -> (i32, i32) {
    %c0_i32 = arith.constant 0 : i32
    %c0_i32_0 = arith.constant 0 : i32
    %c0_i32_1 = arith.constant 0 : i32
    return %c0_i32, %c0_i32_0 : i32, i32
  }
  func.func @transform_19(%arg0: i32) -> (i32, i32) {
    %c0_i32 = arith.constant 0 : i32
    %c0_i32_0 = arith.constant 0 : i32
    %c0_i32_1 = arith.constant 0 : i32
    return %c0_i32, %c0_i32_0 : i32, i32
  }
  func.func @transform_20(%arg0: i32) -> (i32, i32) {
    %c0_i32 = arith.constant 0 : i32
    %c0_i32_0 = arith.constant 0 : i32
    %c0_i32_1 = arith.constant 0 : i32
    return %c0_i32, %c0_i32_0 : i32, i32
  }
  func.func @transform_21(%arg0: i32) -> (i32, i32) {
    %c0_i32 = arith.constant 0 : i32
    %c0_i32_0 = arith.constant 0 : i32
    %c0_i32_1 = arith.constant 0 : i32
    return %c0_i32, %c0_i32_0 : i32, i32
  }
  func.func @transform_22(%arg0: i32) -> (i32, i32) {
    %c0_i32 = arith.constant 0 : i32
    %c0_i32_0 = arith.constant 0 : i32
    %c0_i32_1 = arith.constant 0 : i32
    return %c0_i32, %c0_i32_0 : i32, i32
  }
  func.func @transform_23(%arg0: i32) -> (i32, i32) {
    %c0_i32 = arith.constant 0 : i32
    %c0_i32_0 = arith.constant 0 : i32
    %c0_i32_1 = arith.constant 0 : i32
    return %c0_i32, %c0_i32_0 : i32, i32
  }
  func.func @transform_24(%arg0: i32) -> (i32, i32) {
    %c0_i32 = arith.constant 0 : i32
    %c0_i32_0 = arith.constant 0 : i32
    %c0_i32_1 = arith.constant 0 : i32
    return %c0_i32, %c0_i32_0 : i32, i32
  }
  func.func @transform_25(%arg0: i32) -> (i32, i32) {
    %c0_i32 = arith.constant 0 : i32
    %c0_i32_0 = arith.constant 0 : i32
    %c0_i32_1 = arith.constant 0 : i32
    return %c0_i32, %c0_i32_0 : i32, i32
  }
  func.func @transform_26(%arg0: i32) -> (i32, i32) {
    %c0_i32 = arith.constant 0 : i32
    %c0_i32_0 = arith.constant 0 : i32
    %c0_i32_1 = arith.constant 0 : i32
    return %c0_i32, %c0_i32_0 : i32, i32
  }
  func.func @transform_27(%arg0: i32) -> (i32, i32) {
    %c0_i32 = arith.constant 0 : i32
    %c0_i32_0 = arith.constant 0 : i32
    %c0_i32_1 = arith.constant 0 : i32
    return %c0_i32, %c0_i32_0 : i32, i32
  }
  func.func @transform_28(%arg0: i32) -> (i32, i32) {
    %c0_i32 = arith.constant 0 : i32
    %c0_i32_0 = arith.constant 0 : i32
    %c0_i32_1 = arith.constant 0 : i32
    return %c0_i32, %c0_i32_0 : i32, i32
  }
  func.func @transform_29(%arg0: i32) -> (i32, i32) {
    %c0_i32 = arith.constant 0 : i32
    %c0_i32_0 = arith.constant 0 : i32
    %c0_i32_1 = arith.constant 0 : i32
    return %c0_i32, %c0_i32_0 : i32, i32
  }
}

</mosaic_0001>

<llo_original>
// kernel: tpu_custom_call.1
$region0: #{tpu_custom_call.1}
  #allocation0 [shape = 'u32[]', space=smem, size = 0x4, offset = 0x4, fixed_abs, tag = 'smem constant byte address 0x4 - core index']
  #allocation1 [shape = 'u32[72,128]{1,0:T(1,128)}', space=vmem, size = 0x9000, scoped, tag = 'internal scratch']
  %s0 = inlined_call_operand.smem [shape: u32[30], index: -1, kind: input, shape index: {}]
  %s1 = sld [smem:[%s0]]
  %s2 = scalar_lea.smem %s0, 1
  %s3 = sld [smem:[%s2]]
  %s4 = scalar_lea.smem %s0, 2
  %s5 = sld [smem:[%s4]]
  %s6 = scalar_lea.smem %s0, 3
  %s7 = sld [smem:[%s6]]
  %s8 = scalar_lea.smem %s0, 4
  %s9 = sld [smem:[%s8]]
  %s10 = scalar_lea.smem %s0, 5
  %s11 = sld [smem:[%s10]]
  %s12 = scalar_lea.smem %s0, 6
  %s13 = sld [smem:[%s12]]
  %s14 = scalar_lea.smem %s0, 7
  %s15 = sld [smem:[%s14]]
  %s16 = scalar_lea.smem %s0, 8
  %s17 = sld [smem:[%s16]]
  %s18 = scalar_lea.smem %s0, 9
  %s19 = sld [smem:[%s18]]
  %s20 = scalar_lea.smem %s0, 10
  %s21 = sld [smem:[%s20]]
  %s22 = scalar_lea.smem %s0, 11
  %s23 = sld [smem:[%s22]]
  %s24 = scalar_lea.smem %s0, 12
  %s25 = sld [smem:[%s24]]
  %s26 = scalar_lea.smem %s0, 13
  %s27 = sld [smem:[%s26]]
  %s28 = scalar_lea.smem %s0, 14
  %s29 = sld [smem:[%s28]]
  %s30 = scalar_lea.smem %s0, 15
  %s31 = sld [smem:[%s30]]
  %s32 = scalar_lea.smem %s0, 16
  %s33 = sld [smem:[%s32]]
  %s34 = scalar_lea.smem %s0, 17
  %s35 = sld [smem:[%s34]]
  %s36 = scalar_lea.smem %s0, 18
  %s37 = sld [smem:[%s36]]
  %s38 = scalar_lea.smem %s0, 19
  %s39 = sld [smem:[%s38]]
  %s40 = scalar_lea.smem %s0, 20
  %s41 = sld [smem:[%s40]]
  %s42 = scalar_lea.smem %s0, 21
  %s43 = sld [smem:[%s42]]
  %s44 = scalar_lea.smem %s0, 22
  %s45 = sld [smem:[%s44]]
  %s46 = scalar_lea.smem %s0, 23
  %s47 = sld [smem:[%s46]]
  %s48 = scalar_lea.smem %s0, 24
  %s49 = sld [smem:[%s48]]
  %s50 = scalar_lea.smem %s0, 25
  %s51 = sld [smem:[%s50]]
  %s52 = scalar_lea.smem %s0, 26
  %s53 = sld [smem:[%s52]]
  %s54 = scalar_lea.smem %s0, 27
  %s55 = sld [smem:[%s54]]
  %s56 = scalar_lea.smem %s0, 28
  %s57 = sld [smem:[%s56]]
  %s58 = scalar_lea.smem %s0, 29
  %s59 = sld [smem:[%s58]]
  %s60 = sld [smem:[#allocation0]]
  $region198: #{tpu_custom_call.1} parent=0
    _
  %s62 = ssub.s32 1, %s60
  %s63 = scalar_select 0, %s62, %s60
  $region1: #{tpu_custom_call.1} parent=0
    #allocation2 [shape = 'u8[6144]{0}', space=vmem, size = 0x1800, scoped, tag = 'input window, operand 0, single buffered']
    #allocation3 [shape = 's32[1]{0}', space=sflag, size = 0x4, scoped, tag = 'scoped memory for tpu_custom_call.1']
    #allocation4 [shape = 's32[1]{0}', space=sflag, size = 0x4, scoped, tag = 'scoped memory for tpu_custom_call.1']
    #allocation5 [shape = 'u8[6144]{0}', space=vmem, size = 0x1800, scoped, tag = 'input window, operand 1, single buffered']
    #allocation6 [shape = 's32[1]{0}', space=sflag, size = 0x4, scoped, tag = 'scoped memory for tpu_custom_call.1']
    #allocation7 [shape = 'u8[2048]{0}', space=vmem, size = 0x800, scoped, tag = 'input window, operand 2, single buffered']
    #allocation8 [shape = 'u8[4096]{0}', space=vmem, size = 0x1000, scoped, tag = 'input window, operand 4, single buffered']
    #allocation9 [shape = 's32[1]{0}', space=sflag, size = 0x4, scoped, tag = 'scoped memory for tpu_custom_call.1']
    #allocation10 [shape = 'u8[512]{0}', space=vmem, size = 0x400, scoped, tag = 'input window, operand 5, single buffered']
    #allocation11 [shape = 'u8[512]{0}', space=vmem, size = 0x400, scoped, tag = 'input window, operand 7, single buffered']
    #allocation12 [shape = 's32[1]{0}', space=sflag, size = 0x4, scoped, tag = 'scoped memory for tpu_custom_call.1']
    #allocation13 [shape = 'u8[512]{0}', space=vmem, size = 0x400, scoped, tag = 'input window, operand 8, single buffered']
    #allocation14 [shape = 'u8[512]{0}', space=vmem, size = 0x400, scoped, tag = 'input window, operand 10, single buffered']
    #allocation15 [shape = 's32[1]{0}', space=sflag, size = 0x4, scoped, tag = 'scoped memory for tpu_custom_call.1']
    #allocation16 [shape = 'u8[512]{0}', space=vmem, size = 0x400, scoped, tag = 'input window, operand 11, single buffered']
    #allocation17 [shape = 'u8[8192]{0}', space=vmem, size = 0x2000, scoped, tag = 'input window, operand 12, single buffered']
    #allocation18 [shape = 's32[1]{0}', space=sflag, size = 0x4, scoped, tag = 'scoped memory for tpu_custom_call.1']
    #allocation19 [shape = 'u8[512]{0}', space=vmem, size = 0x400, scoped, tag = 'input window, operand 14, single buffered']
    #allocation20 [shape = 'u8[512]{0}', space=vmem, size = 0x400, scoped, tag = 'input window, operand 15, single buffered']
    #allocation21 [shape = 's32[1]{0}', space=sflag, size = 0x4, scoped, tag = 'scoped memory for tpu_custom_call.1']
    #allocation22 [shape = 'u8[8192]{0}', space=vmem, size = 0x2000, scoped, tag = 'input window, operand 16, single buffered']
    #allocation23 [shape = 'u8[8192]{0}', space=vmem, size = 0x2000, scoped, tag = 'input window, operand 17, single buffered']
    #allocation24 [shape = 's32[1]{0}', space=sflag, size = 0x4, scoped, tag = 'scoped memory for tpu_custom_call.1']
    #allocation25 [shape = 'u8[512]{0}', space=vmem, size = 0x400, scoped, tag = 'input window, operand 18, single buffered']
    #allocation26 [shape = 'u8[512]{0}', space=vmem, size = 0x400, scoped, tag = 'input window, operand 19, single buffered']
    #allocation27 [shape = 's32[1]{0}', space=sflag, size = 0x4, scoped, tag = 'scoped memory for tpu_custom_call.1']
    #allocation28 [shape = 'u8[8192]{0}', space=vmem, size = 0x2000, scoped, tag = 'input window, operand 20, single buffered']
    #allocation29 [shape = 'u8[8192]{0}', space=vmem, size = 0x2000, scoped, tag = 'input window, operand 21, single buffered']
    #allocation30 [shape = 's32[1]{0}', space=sflag, size = 0x4, scoped, tag = 'scoped memory for tpu_custom_call.1']
    #allocation31 [shape = 'u8[4096]{0}', space=vmem, size = 0x1000, scoped, tag = 'output window, operand 0, single buffered']
    %64 = vsyncpa [#allocation3], 0
    %65 = vsyncpa [#allocation6], 0
    %66 = vsyncpa [#allocation9], 0
    %67 = vsyncpa [#allocation12], 0
    %68 = vsyncpa [#allocation15], 0
    %69 = vsyncpa [#allocation18], 0
    %70 = vsyncpa [#allocation21], 0
    %71 = vsyncpa [#allocation24], 0
    %72 = vsyncpa [#allocation27], 0
    %73 = vsyncpa [#allocation30], 0
    %74 = vsyncpa [#allocation4], 0
    // Predicated region
    $region2: #{tpu_custom_call.1} parent=1 // pred_check
      _
    $region3: #{tpu_custom_call.1} parent=1 // pred_check_branch
      %76 = sbr.rel (0) target = $region5
    $region4: #{tpu_custom_call.1} parent=1 // pred_region
      %78 = vsyncadd [#allocation3], 0
      %s79 = sshll.u32 %s1, 4
      %s80 = int_to_ptr.hbm [resolvable:$true] %s79
      %s81 = sshll.u32 [#allocation2], 4
      %s82 = int_to_ptr.vmem [resolvable:$true] %s81
      %87 = dma.hbm_to_vmem [thread:$0]  %s80, 192, %s82, [#allocation3], 64, 64, 4
    $region5: #{tpu_custom_call.1} parent=1 // pred_fallthru
      _
    // Predicated region
    $region6: #{tpu_custom_call.1} parent=1 // pred_check
      _
    $region7: #{tpu_custom_call.1} parent=1 // pred_check_branch
      %89 = sbr.rel (0) target = $region9
    $region8: #{tpu_custom_call.1} parent=1 // pred_region
      %91 = vsyncadd [#allocation6], 0
      %s92 = sshll.u32 %s3, 4
      %s93 = int_to_ptr.hbm [resolvable:$true] %s92
      %s94 = sshll.u32 [#allocation5], 4
      %s95 = int_to_ptr.vmem [resolvable:$true] %s94
      %100 = dma.hbm_to_vmem [thread:$0]  %s93, 192, %s95, [#allocation6], 64, 64, 4
    $region9: #{tpu_custom_call.1} parent=1 // pred_fallthru
      _
    // Predicated region
    $region10: #{tpu_custom_call.1} parent=1 // pred_check
      _
    $region11: #{tpu_custom_call.1} parent=1 // pred_check_branch
      %102 = sbr.rel (0) target = $region13
    $region12: #{tpu_custom_call.1} parent=1 // pred_region
      %104 = vsyncadd [#allocation6], 0
      %s106 = sshll.u32 %s5, 4
      %s107 = int_to_ptr.hbm [resolvable:$true] %s106
      %s108 = sshll.u32 [#allocation7], 4
      %s109 = int_to_ptr.vmem [resolvable:$true] %s108
      %111 = dma.hbm_to_vmem [thread:$0]  %s107, 64, %s109, [#allocation6]
    $region13: #{tpu_custom_call.1} parent=1 // pred_fallthru
      _
    // Predicated region
    $region14: #{tpu_custom_call.1} parent=1 // pred_check
      _
    $region15: #{tpu_custom_call.1} parent=1 // pred_check_branch
      %113 = sbr.rel (0) target = $region17
    $region16: #{tpu_custom_call.1} parent=1 // pred_region
      _
    $region17: #{tpu_custom_call.1} parent=1 // pred_fallthru
      _
    // Predicated region
    $region18: #{tpu_custom_call.1} parent=1 // pred_check
      _
    $region19: #{tpu_custom_call.1} parent=1 // pred_check_branch
      %115 = sbr.rel (0) target = $region21
    $region20: #{tpu_custom_call.1} parent=1 // pred_region
      %117 = vsyncadd [#allocation9], 0
      %s118 = sshll.u32 %s9, 4
      %s119 = int_to_ptr.hbm [resolvable:$true] %s118
      %s120 = sshll.u32 [#allocation8], 4
      %s121 = int_to_ptr.vmem [resolvable:$true] %s120
      %126 = dma.hbm_to_vmem [thread:$0]  %s119, 128, %s121, [#allocation9], 64, 64, 4
    $region21: #{tpu_custom_call.1} parent=1 // pred_fallthru
      _
    // Predicated region
    $region22: #{tpu_custom_call.1} parent=1 // pred_check
      _
    $region23: #{tpu_custom_call.1} parent=1 // pred_check_branch
      %128 = sbr.rel (0) target = $region25
    $region24: #{tpu_custom_call.1} parent=1 // pred_region
      %130 = vsyncadd [#allocation9], 0
      %s132 = sshll.u32 %s11, 4
      %s133 = int_to_ptr.hbm [resolvable:$true] %s132
      %s134 = sshll.u32 [#allocation10], 4
      %s135 = int_to_ptr.vmem [resolvable:$true] %s134
      %137 = dma.hbm_to_vmem [thread:$0]  %s133, 16, %s135, [#allocation9]
    $region25: #{tpu_custom_call.1} parent=1 // pred_fallthru
      _
    // Predicated region
    $region26: #{tpu_custom_call.1} parent=1 // pred_check
      _
    $region27: #{tpu_custom_call.1} parent=1 // pred_check_branch
      %139 = sbr.rel (0) target = $region29
    $region28: #{tpu_custom_call.1} parent=1 // pred_region
      _
    $region29: #{tpu_custom_call.1} parent=1 // pred_fallthru
      _
    // Predicated region
    $region30: #{tpu_custom_call.1} parent=1 // pred_check
      _
    $region31: #{tpu_custom_call.1} parent=1 // pred_check_branch
      %141 = sbr.rel (0) target = $region33
    $region32: #{tpu_custom_call.1} parent=1 // pred_region
      %143 = vsyncadd [#allocation12], 0
      %s145 = sshll.u32 %s15, 4
      %s146 = int_to_ptr.hbm [resolvable:$true] %s145
      %s147 = sshll.u32 [#allocation11], 4
      %s148 = int_to_ptr.vmem [resolvable:$true] %s147
      %150 = dma.hbm_to_vmem [thread:$0]  %s146, 16, %s148, [#allocation12]
    $region33: #{tpu_custom_call.1} parent=1 // pred_fallthru
      _
    // Predicated region
    $region34: #{tpu_custom_call.1} parent=1 // pred_check
      _
    $region35: #{tpu_custom_call.1} parent=1 // pred_check_branch
      %152 = sbr.rel (0) target = $region37
    $region36: #{tpu_custom_call.1} parent=1 // pred_region
      %154 = vsyncadd [#allocation12], 0
      %s156 = sshll.u32 %s17, 4
      %s157 = int_to_ptr.hbm [resolvable:$true] %s156
      %s158 = sshll.u32 [#allocation13], 4
      %s159 = int_to_ptr.vmem [resolvable:$true] %s158
      %161 = dma.hbm_to_vmem [thread:$0]  %s157, 16, %s159, [#allocation12]
    $region37: #{tpu_custom_call.1} parent=1 // pred_fallthru
      _
    // Predicated region
    $region38: #{tpu_custom_call.1} parent=1 // pred_check
      _
    $region39: #{tpu_custom_call.1} parent=1 // pred_check_branch
      %163 = sbr.rel (0) target = $region41
    $region40: #{tpu_custom_call.1} parent=1 // pred_region
      _
    $region41: #{tpu_custom_call.1} parent=1 // pred_fallthru
      _
    // Predicated region
    $region42: #{tpu_custom_call.1} parent=1 // pred_check
      _
    $region43: #{tpu_custom_call.1} parent=1 // pred_check_branch
      %165 = sbr.rel (0) target = $region45
    $region44: #{tpu_custom_call.1} parent=1 // pred_region
      %167 = vsyncadd [#allocation15], 0
      %s169 = sshll.u32 %s21, 4
      %s170 = int_to_ptr.hbm [resolvable:$true] %s169
      %s171 = sshll.u32 [#allocation14], 4
      %s172 = int_to_ptr.vmem [resolvable:$true] %s171
      %174 = dma.hbm_to_vmem [thread:$0]  %s170, 16, %s172, [#allocation15]
    $region45: #{tpu_custom_call.1} parent=1 // pred_fallthru
      _
    // Predicated region
    $region46: #{tpu_custom_call.1} parent=1 // pred_check
      _
    $region47: #{tpu_custom_call.1} parent=1 // pred_check_branch
      %176 = sbr.rel (0) target = $region49
    $region48: #{tpu_custom_call.1} parent=1 // pred_region
      %178 = vsyncadd [#allocation15], 0
      %s180 = sshll.u32 %s23, 4
      %s181 = int_to_ptr.hbm [resolvable:$true] %s180
      %s182 = sshll.u32 [#allocation16], 4
      %s183 = int_to_ptr.vmem [resolvable:$true] %s182
      %185 = dma.hbm_to_vmem [thread:$0]  %s181, 16, %s183, [#allocation15]
    $region49: #{tpu_custom_call.1} parent=1 // pred_fallthru
      _
    // Predicated region
    $region50: #{tpu_custom_call.1} parent=1 // pred_check
      _
    $region51: #{tpu_custom_call.1} parent=1 // pred_check_branch
      %187 = sbr.rel (0) target = $region53
    $region52: #{tpu_custom_call.1} parent=1 // pred_region
      %189 = vsyncadd [#allocation18], 0
      %s190 = sshll.u32 %s25, 4
      %s191 = int_to_ptr.hbm [resolvable:$true] %s190
      %s192 = sshll.u32 [#allocation17], 4
      %s193 = int_to_ptr.vmem [resolvable:$true] %s192
      %198 = dma.hbm_to_vmem [thread:$0]  %s191, 256, %s193, [#allocation18], 64, 64, 4
    $region53: #{tpu_custom_call.1} parent=1 // pred_fallthru
      _
    // Predicated region
    $region54: #{tpu_custom_call.1} parent=1 // pred_check
      _
    $region55: #{tpu_custom_call.1} parent=1 // pred_check_branch
      %200 = sbr.rel (0) target = $region57
    $region56: #{tpu_custom_call.1} parent=1 // pred_region
      _
    $region57: #{tpu_custom_call.1} parent=1 // pred_fallthru
      _
    // Predicated region
    $region58: #{tpu_custom_call.1} parent=1 // pred_check
      _
    $region59: #{tpu_custom_call.1} parent=1 // pred_check_branch
      %202 = sbr.rel (0) target = $region61
    $region60: #{tpu_custom_call.1} parent=1 // pred_region
      %204 = vsyncadd [#allocation18], 0
      %s206 = sshll.u32 %s29, 4
      %s207 = int_to_ptr.hbm [resolvable:$true] %s206
      %s208 = sshll.u32 [#allocation19], 4
      %s209 = int_to_ptr.vmem [resolvable:$true] %s208
      %211 = dma.hbm_to_vmem [thread:$0]  %s207, 16, %s209, [#allocation18]
    $region61: #{tpu_custom_call.1} parent=1 // pred_fallthru
      _
    // Predicated region
    $region62: #{tpu_custom_call.1} parent=1 // pred_check
      _
    $region63: #{tpu_custom_call.1} parent=1 // pred_check_branch
      %213 = sbr.rel (0) target = $region65
    $region64: #{tpu_custom_call.1} parent=1 // pred_region
      %215 = vsyncadd [#allocation21], 0
      %s217 = sshll.u32 %s31, 4
      %s218 = int_to_ptr.hbm [resolvable:$true] %s217
      %s219 = sshll.u32 [#allocation20], 4
      %s220 = int_to_ptr.vmem [resolvable:$true] %s219
      %222 = dma.hbm_to_vmem [thread:$0]  %s218, 16, %s220, [#allocation21]
    $region65: #{tpu_custom_call.1} parent=1 // pred_fallthru
      _
    // Predicated region
    $region66: #{tpu_custom_call.1} parent=1 // pred_check
      _
    $region67: #{tpu_custom_call.1} parent=1 // pred_check_branch
      %224 = sbr.rel (0) target = $region69
    $region68: #{tpu_custom_call.1} parent=1 // pred_region
      %226 = vsyncadd [#allocation21], 0
      %s227 = sshll.u32 %s33, 4
      %s228 = int_to_ptr.hbm [resolvable:$true] %s227
      %s229 = sshll.u32 [#allocation22], 4
      %s230 = int_to_ptr.vmem [resolvable:$true] %s229
      %235 = dma.hbm_to_vmem [thread:$0]  %s228, 256, %s230, [#allocation21], 64, 64, 4
    $region69: #{tpu_custom_call.1} parent=1 // pred_fallthru
      _
    // Predicated region
    $region70: #{tpu_custom_call.1} parent=1 // pred_check
      _
    $region71: #{tpu_custom_call.1} parent=1 // pred_check_branch
      %237 = sbr.rel (0) target = $region73
    $region72: #{tpu_custom_call.1} parent=1 // pred_region
      %239 = vsyncadd [#allocation24], 0
      %s240 = sshll.u32 %s35, 4
      %s241 = int_to_ptr.hbm [resolvable:$true] %s240
      %s242 = sshll.u32 [#allocation23], 4
      %s243 = int_to_ptr.vmem [resolvable:$true] %s242
      %248 = dma.hbm_to_vmem [thread:$0]  %s241, 256, %s243, [#allocation24], 64, 64, 4
    $region73: #{tpu_custom_call.1} parent=1 // pred_fallthru
      _
    // Predicated region
    $region74: #{tpu_custom_call.1} parent=1 // pred_check
      _
    $region75: #{tpu_custom_call.1} parent=1 // pred_check_branch
      %250 = sbr.rel (0) target = $region77
    $region76: #{tpu_custom_call.1} parent=1 // pred_region
      %252 = vsyncadd [#allocation24], 0
      %s254 = sshll.u32 %s37, 4
      %s255 = int_to_ptr.hbm [resolvable:$true] %s254
      %s256 = sshll.u32 [#allocation25], 4
      %s257 = int_to_ptr.vmem [resolvable:$true] %s256
      %259 = dma.hbm_to_vmem [thread:$0]  %s255, 16, %s257, [#allocation24]
    $region77: #{tpu_custom_call.1} parent=1 // pred_fallthru
      _
    // Predicated region
    $region78: #{tpu_custom_call.1} parent=1 // pred_check
      _
    $region79: #{tpu_custom_call.1} parent=1 // pred_check_branch
      %261 = sbr.rel (0) target = $region81
    $region80: #{tpu_custom_call.1} parent=1 // pred_region
      %263 = vsyncadd [#allocation27], 0
      %s265 = sshll.u32 %s39, 4
      %s266 = int_to_ptr.hbm [resolvable:$true] %s265
      %s267 = sshll.u32 [#allocation26], 4
      %s268 = int_to_ptr.vmem [resolvable:$true] %s267
      %270 = dma.hbm_to_vmem [thread:$0]  %s266, 16, %s268, [#allocation27]
    $region81: #{tpu_custom_call.1} parent=1 // pred_fallthru
      _
    // Predicated region
    $region82: #{tpu_custom_call.1} parent=1 // pred_check
      _
    $region83: #{tpu_custom_call.1} parent=1 // pred_check_branch
      %272 = sbr.rel (0) target = $region85
    $region84: #{tpu_custom_call.1} parent=1 // pred_region
      %274 = vsyncadd [#allocation27], 0
      %s275 = sshll.u32 %s41, 4
      %s276 = int_to_ptr.hbm [resolvable:$true] %s275
      %s277 = sshll.u32 [#allocation28], 4
      %s278 = int_to_ptr.vmem [resolvable:$true] %s277
      %283 = dma.hbm_to_vmem [thread:$0]  %s276, 256, %s278, [#allocation27], 64, 64, 4
    $region85: #{tpu_custom_call.1} parent=1 // pred_fallthru
      _
    // Predicated region
    $region86: #{tpu_custom_call.1} parent=1 // pred_check
      _
    $region87: #{tpu_custom_call.1} parent=1 // pred_check_branch
      %285 = sbr.rel (0) target = $region89
    $region88: #{tpu_custom_call.1} parent=1 // pred_region
      %287 = vsyncadd [#allocation30], 0
      %s288 = sshll.u32 %s43, 4
      %s289 = int_to_ptr.hbm [resolvable:$true] %s288
      %s290 = sshll.u32 [#allocation29], 4
      %s291 = int_to_ptr.vmem [resolvable:$true] %s290
      %296 = dma.hbm_to_vmem [thread:$0]  %s289, 256, %s291, [#allocation30], 64, 64, 4
    $region89: #{tpu_custom_call.1} parent=1 // pred_fallthru
      _
    // Predicated region
    $region90: #{tpu_custom_call.1} parent=1 // pred_check
      _
    $region91: #{tpu_custom_call.1} parent=1 // pred_check_branch
      %298 = sbr.rel (0) target = $region93
    $region92: #{tpu_custom_call.1} parent=1 // pred_region
      _
    $region93: #{tpu_custom_call.1} parent=1 // pred_fallthru
      _
    // Predicated region
    $region94: #{tpu_custom_call.1} parent=1 // pred_check
      _
    $region95: #{tpu_custom_call.1} parent=1 // pred_check_branch
      %300 = sbr.rel (0) target = $region97
    $region96: #{tpu_custom_call.1} parent=1 // pred_region
      _
    $region97: #{tpu_custom_call.1} parent=1 // pred_fallthru
      _
    // Predicated region
    $region98: #{tpu_custom_call.1} parent=1 // pred_check
      _
    $region99: #{tpu_custom_call.1} parent=1 // pred_check_branch
      %302 = sbr.rel (0) target = $region101
    $region100: #{tpu_custom_call.1} parent=1 // pred_region
      _
    $region101: #{tpu_custom_call.1} parent=1 // pred_fallthru
      _
    // Predicated region
    $region102: #{tpu_custom_call.1} parent=1 // pred_check
      _
    $region103: #{tpu_custom_call.1} parent=1 // pred_check_branch
      %304 = sbr.rel (0) target = $region105
    $region104: #{tpu_custom_call.1} parent=1 // pred_region
      _
    $region105: #{tpu_custom_call.1} parent=1 // pred_fallthru
      _
    // Predicated region
    $region106: #{tpu_custom_call.1} parent=1 // pred_check
      _
    $region107: #{tpu_custom_call.1} parent=1 // pred_check_branch
      %306 = sbr.rel (0) target = $region109
    $region108: #{tpu_custom_call.1} parent=1 // pred_region
      _
    $region109: #{tpu_custom_call.1} parent=1 // pred_fallthru
      _
    // Predicated region
    $region110: #{tpu_custom_call.1} parent=1 // pred_check
      _
    $region111: #{tpu_custom_call.1} parent=1 // pred_check_branch
      %308 = sbr.rel (0) target = $region113
    $region112: #{tpu_custom_call.1} parent=1 // pred_region
      _
    $region113: #{tpu_custom_call.1} parent=1 // pred_fallthru
      _
    // Predicated region
    $region114: #{tpu_custom_call.1} parent=1 // pred_check
      _
    $region115: #{tpu_custom_call.1} parent=1 // pred_check_branch
      %310 = sbr.rel (0) target = $region117
    $region116: #{tpu_custom_call.1} parent=1 // pred_region
      _
    $region117: #{tpu_custom_call.1} parent=1 // pred_fallthru
      _
    // Predicated region
    $region118: #{tpu_custom_call.1} parent=1 // pred_check
      _
    $region119: #{tpu_custom_call.1} parent=1 // pred_check_branch
      %312 = sbr.rel (0) target = $region121
    $region120: #{tpu_custom_call.1} parent=1 // pred_region
      %314 = dma.done [#allocation3], 192
    $region121: #{tpu_custom_call.1} parent=1 // pred_fallthru
      _
    // Predicated region
    $region122: #{tpu_custom_call.1} parent=1 // pred_check
      _
    $region123: #{tpu_custom_call.1} parent=1 // pred_check_branch
      %316 = sbr.rel (0) target = $region125
    $region124: #{tpu_custom_call.1} parent=1 // pred_region
      %318 = dma.done [#allocation6], 192
    $region125: #{tpu_custom_call.1} parent=1 // pred_fallthru
      _
    // Predicated region
    $region126: #{tpu_custom_call.1} parent=1 // pred_check
      _
    $region127: #{tpu_custom_call.1} parent=1 // pred_check_branch
      %320 = sbr.rel (0) target = $region129
    $region128: #{tpu_custom_call.1} parent=1 // pred_region
      %322 = dma.done [#allocation6], 64
    $region129: #{tpu_custom_call.1} parent=1 // pred_fallthru
      _
    // Predicated region
    $region130: #{tpu_custom_call.1} parent=1 // pred_check
      _
    $region131: #{tpu_custom_call.1} parent=1 // pred_check_branch
      %324 = sbr.rel (0) target = $region133
    $region132: #{tpu_custom_call.1} parent=1 // pred_region
      %326 = dma.done [#allocation9], 128
    $region133: #{tpu_custom_call.1} parent=1 // pred_fallthru
      _
    // Predicated region
    $region134: #{tpu_custom_call.1} parent=1 // pred_check
      _
    $region135: #{tpu_custom_call.1} parent=1 // pred_check_branch
      %328 = sbr.rel (0) target = $region137
    $region136: #{tpu_custom_call.1} parent=1 // pred_region
      %330 = dma.done [#allocation9], 16
    $region137: #{tpu_custom_call.1} parent=1 // pred_fallthru
      _
    // Predicated region
    $region138: #{tpu_custom_call.1} parent=1 // pred_check
      _
    $region139: #{tpu_custom_call.1} parent=1 // pred_check_branch
      %332 = sbr.rel (0) target = $region141
    $region140: #{tpu_custom_call.1} parent=1 // pred_region
      %334 = dma.done [#allocation12], 16
    $region141: #{tpu_custom_call.1} parent=1 // pred_fallthru
      _
    // Predicated region
    $region142: #{tpu_custom_call.1} parent=1 // pred_check
      _
    $region143: #{tpu_custom_call.1} parent=1 // pred_check_branch
      %336 = sbr.rel (0) target = $region145
    $region144: #{tpu_custom_call.1} parent=1 // pred_region
      %338 = dma.done [#allocation12], 16
    $region145: #{tpu_custom_call.1} parent=1 // pred_fallthru
      _
    // Predicated region
    $region146: #{tpu_custom_call.1} parent=1 // pred_check
      _
    $region147: #{tpu_custom_call.1} parent=1 // pred_check_branch
      %340 = sbr.rel (0) target = $region149
    $region148: #{tpu_custom_call.1} parent=1 // pred_region
      %342 = dma.done [#allocation15], 16
    $region149: #{tpu_custom_call.1} parent=1 // pred_fallthru
      _
    // Predicated region
    $region150: #{tpu_custom_call.1} parent=1 // pred_check
      _
    $region151: #{tpu_custom_call.1} parent=1 // pred_check_branch
      %344 = sbr.rel (0) target = $region153
    $region152: #{tpu_custom_call.1} parent=1 // pred_region
      %346 = dma.done [#allocation15], 16
    $region153: #{tpu_custom_call.1} parent=1 // pred_fallthru
      _
    // Predicated region
    $region154: #{tpu_custom_call.1} parent=1 // pred_check
      _
    $region155: #{tpu_custom_call.1} parent=1 // pred_check_branch
      %348 = sbr.rel (0) target = $region157
    $region156: #{tpu_custom_call.1} parent=1 // pred_region
      %350 = dma.done [#allocation18], 256
    $region157: #{tpu_custom_call.1} parent=1 // pred_fallthru
      _
    // Predicated region
    $region158: #{tpu_custom_call.1} parent=1 // pred_check
      _
    $region159: #{tpu_custom_call.1} parent=1 // pred_check_branch
      %352 = sbr.rel (0) target = $region161
    $region160: #{tpu_custom_call.1} parent=1 // pred_region
      %354 = dma.done [#allocation18], 16
    $region161: #{tpu_custom_call.1} parent=1 // pred_fallthru
      _
    // Predicated region
    $region162: #{tpu_custom_call.1} parent=1 // pred_check
      _
    $region163: #{tpu_custom_call.1} parent=1 // pred_check_branch
      %356 = sbr.rel (0) target = $region165
    $region164: #{tpu_custom_call.1} parent=1 // pred_region
      %358 = dma.done [#allocation21], 16
    $region165: #{tpu_custom_call.1} parent=1 // pred_fallthru
      _
    // Predicated region
    $region166: #{tpu_custom_call.1} parent=1 // pred_check
      _
    $region167: #{tpu_custom_call.1} parent=1 // pred_check_branch
      %360 = sbr.rel (0) target = $region169
    $region168: #{tpu_custom_call.1} parent=1 // pred_region
      %362 = dma.done [#allocation21], 256
    $region169: #{tpu_custom_call.1} parent=1 // pred_fallthru
      _
    // Predicated region
    $region170: #{tpu_custom_call.1} parent=1 // pred_check
      _
    $region171: #{tpu_custom_call.1} parent=1 // pred_check_branch
      %364 = sbr.rel (0) target = $region173
    $region172: #{tpu_custom_call.1} parent=1 // pred_region
      %366 = dma.done [#allocation24], 256
    $region173: #{tpu_custom_call.1} parent=1 // pred_fallthru
      _
    // Predicated region
    $region174: #{tpu_custom_call.1} parent=1 // pred_check
      _
    $region175: #{tpu_custom_call.1} parent=1 // pred_check_branch
      %368 = sbr.rel (0) target = $region177
    $region176: #{tpu_custom_call.1} parent=1 // pred_region
      %370 = dma.done [#allocation24], 16
    $region177: #{tpu_custom_call.1} parent=1 // pred_fallthru
      _
    // Predicated region
    $region178: #{tpu_custom_call.1} parent=1 // pred_check
      _
    $region179: #{tpu_custom_call.1} parent=1 // pred_check_branch
      %372 = sbr.rel (0) target = $region181
    $region180: #{tpu_custom_call.1} parent=1 // pred_region
      %374 = dma.done [#allocation27], 16
    $region181: #{tpu_custom_call.1} parent=1 // pred_fallthru
      _
    // Predicated region
    $region182: #{tpu_custom_call.1} parent=1 // pred_check
      _
    $region183: #{tpu_custom_call.1} parent=1 // pred_check_branch
      %376 = sbr.rel (0) target = $region185
    $region184: #{tpu_custom_call.1} parent=1 // pred_region
      %378 = dma.done [#allocation27], 256
    $region185: #{tpu_custom_call.1} parent=1 // pred_fallthru
      _
    // Predicated region
    $region186: #{tpu_custom_call.1} parent=1 // pred_check
      _
    $region187: #{tpu_custom_call.1} parent=1 // pred_check_branch
      %380 = sbr.rel (0) target = $region189
    $region188: #{tpu_custom_call.1} parent=1 // pred_region
      %382 = dma.done [#allocation30], 256
    $region189: #{tpu_custom_call.1} parent=1 // pred_fallthru
      _
    %v384 = vld [vmem:[#allocation2] sm:$0xf]
    %v385 = vld [vmem:[#allocation2 + $0x4] sm:$0xf]
    %v386 = vld [vmem:[#allocation2 + $0x8] sm:$0xf]
    %v387 = vld [vmem:[#allocation5] sm:$0xf]
    %v388 = vld [vmem:[#allocation5 + $0x4] sm:$0xf]
    %v389 = vld [vmem:[#allocation5 + $0x8] sm:$0xf]
    %v390 = vld [vmem:[#allocation7] sm:$0xf]
    %v391 = vld [vmem:[%s7] sm:$0xf]
    %v392 = vld [vmem:[%s7 + $0x4] sm:$0xf]
    %v393 = vld [vmem:[%s7 + $0x8] sm:$0xf]
    %v394 = vld [vmem:[#allocation8] sm:$0xf]
    %v395 = vld [vmem:[#allocation8 + $0x4] sm:$0xf]
    %v396 = vld [vmem:[#allocation10] sm:$0x1]
    %v398 = vperm.slane %v396, 0
    %v403 = vunpack.c.l.b16 %v391
    %v404 = vunpack.c.l.b16 %v392
    %v405 = vunpack.c.l.b16 %v393
    %v406 = vpack.c.b16 %v404, %v403
    %v407 = vpack.c.b16 %v405, %v405
    %v410 = vunpack.c.l.b16 %v394
    %v411 = vunpack.c.l.b16 %v395
    %v412 = vpack.c.b16 %v411, %v410
    %vm414 = vcmask 130048
    %v416 = vsel %vm414, %v406, 0
    %v419 = vsel %vm414, %v407, 0
    %421 = vmatpush.bf16.msra.mxu0 0
    %422 = vmatpush.bf16.msra.mxu0 0
    %423 = vmatpush.bf16.msra.mxu0 0
    %424 = vmatpush.bf16.msra.mxu0 0
    %425 = vmatpush.bf16.msra.mxu0 0
    %426 = vmatpush.bf16.msra.mxu0 0
    %427 = vmatpush.bf16.msra.mxu0 0
    %428 = vmatpush.bf16.msra.mxu0 %v412
    %429 = vmatmul.bf16.gmra.mxu0 %v416
    %v430 = vpop.f32.mrf.mxu0
    %v431 = vadd.f32 %v398, %v430
    %v432 = vpop.f32.mrf.mxu0
    %v433 = vadd.f32 %v398, %v432
    %434 = vmatmul.bf16.gmra.mxu0 %v419
    %v435 = vpop.f32.mrf.mxu0
    %v436 = vadd.f32 %v398, %v435
    %v437 = vpop.f32.mrf.mxu0
    %438 = vdwg.mxu0
    %v439 = vmax.f32 %v431, 0.0
    %v440 = vmax.f32 %v433, 0.0
    %v441 = vmax.f32 %v436, 0.0
    %v442 = vpack.c.bf16 %v440, %v439
    %v443 = vpack.c.bf16 %v441, %v441
    %v444 = vld [vmem:[%s13] sm:$0xf]
    %v445 = vld [vmem:[%s13 + $0x4] sm:$0xf]
    %v446 = vld [vmem:[%s13 + $0x8] sm:$0xf]
    %v447 = vld [vmem:[%s13 + $0xc] sm:$0xf]
    %v448 = vld [vmem:[#allocation11] sm:$0x1]
    %v449 = vld [vmem:[#allocation13] sm:$0x1]
    %v454 = vunpack.c.l.b16 %v444
    %v455 = vunpack.c.l.b16 %v445
    %v456 = vunpack.c.l.b16 %v446
    %v457 = vunpack.c.l.b16 %v447
    %v458 = vpack.c.b16 %v455, %v454
    %v459 = vpack.c.b16 %v457, %v456
    %vm462 = vcmask 261120
    %v464 = vsel %vm462, %v442, 0
    %v467 = vsel %vm462, %v443, 0
    %469 = vmatpush.bf16.msra.mxu0 0
    %470 = vmatpush.bf16.msra.mxu0 0
    %471 = vmatpush.bf16.msra.mxu0 0
    %472 = vmatpush.bf16.msra.mxu0 0
    %473 = vmatpush.bf16.msra.mxu0 0
    %474 = vmatpush.bf16.msra.mxu0 0
    %475 = vmatpush.bf16.msra.mxu0 %v459
    %476 = vmatpush.bf16.msra.mxu0 %v458
    %477 = vmatmul.bf16.gmra.mxu0 %v464
    %v478 = vpop.f32.mrf.mxu0
    %v479 = vadd.f32 0.0, %v478
    %v480 = vpop.f32.mrf.mxu0
    %v481 = vadd.f32 0.0, %v480
    %482 = vmatmul.bf16.gmra.mxu0 %v467
    %v483 = vpop.f32.mrf.mxu0
    %v484 = vadd.f32 0.0, %v483
    %v485 = vpop.f32.mrf.mxu0
    %486 = vdwg.mxu0
    %v487 = vpack.c.bf16 %v481, %v479
    %v488 = vpack.c.bf16 %v484, %v484
    %v492 = vunpack.c.l.b16 %v384
    %v493 = vunpack.c.l.b16 %v385
    %v494 = vunpack.c.l.b16 %v386
    %v495 = vpack.c.b16 %v493, %v492
    %v496 = vpack.c.b16 %v494, %v494
    %vm497 = vcmask 195584
    %v499 = vsel %vm497, %v495, 0
    %v502 = vsel %vm497, %v496, 0
    %vm504 = vcmask 1043456
    %v506 = vsel %vm504, %v488, 0
    %508 = vmatpush.bf16.msra.mxu0 0
    %509 = vmatpush.bf16.msra.mxu0 0
    %510 = vmatpush.bf16.msra.mxu0 0
    %511 = vmatpush.bf16.msra.mxu0 0
    %512 = vmatpush.bf16.msra.mxu0 0
    %513 = vmatpush.bf16.msra.mxu0 0
    %514 = vmatpush.bf16.msra.mxu0 %v506
    %515 = vmatpush.bf16.msra.mxu0 %v487
    %516 = vmatmul.bf16.gmra.mxu0 %v499
    %v517 = vpop.f32.mrf.mxu0
    %v518 = vadd.f32 0.0, %v517
    %v519 = vpop.f32.mrf.mxu0
    %v520 = vadd.f32 0.0, %v519
    %521 = vmatmul.bf16.gmra.mxu0 %v502
    %v522 = vpop.f32.mrf.mxu0
    %v523 = vadd.f32 0.0, %v522
    %v524 = vpop.f32.mrf.mxu0
    %525 = vdwg.mxu0
    %v527 = vperm.slane %v448, 0
    %v529 = vmul.f32 %v518, %v527
    %v530 = vmul.f32 %v520, %v527
    %v531 = vmul.f32 %v523, %v527
    %v533 = vperm.slane %v449, 0
    %v535 = vadd.f32 %v529, %v533
    %v536 = vadd.f32 %v530, %v533
    %v537 = vadd.f32 %v531, %v533
    %v538 = vmax.f32 %v535, 0.0
    %v539 = vmax.f32 %v536, 0.0
    %v540 = vmax.f32 %v537, 0.0
    %v541 = vpack.c.bf16 %v539, %v538
    %v542 = vpack.c.bf16 %v540, %v540
    %v543 = vld [vmem:[%s19] sm:$0xf]
    %v544 = vld [vmem:[%s19 + $0x4] sm:$0xf]
    %v545 = vld [vmem:[%s19 + $0x8] sm:$0xf]
    %v546 = vld [vmem:[%s19 + $0xc] sm:$0xf]
    %v547 = vld [vmem:[#allocation14] sm:$0x1]
    %v548 = vld [vmem:[#allocation16] sm:$0x1]
    %v553 = vunpack.c.l.b16 %v543
    %v554 = vunpack.c.l.b16 %v544
    %v555 = vunpack.c.l.b16 %v545
    %v556 = vunpack.c.l.b16 %v546
    %v557 = vpack.c.b16 %v554, %v553
    %v558 = vpack.c.b16 %v556, %v555
    %v562 = vsel %vm462, %v541, 0
    %v565 = vsel %vm462, %v542, 0
    %567 = vmatpush.bf16.msra.mxu0 0
    %568 = vmatpush.bf16.msra.mxu0 0
    %569 = vmatpush.bf16.msra.mxu0 0
    %570 = vmatpush.bf16.msra.mxu0 0
    %571 = vmatpush.bf16.msra.mxu0 0
    %572 = vmatpush.bf16.msra.mxu0 0
    %573 = vmatpush.bf16.msra.mxu0 %v558
    %574 = vmatpush.bf16.msra.mxu0 %v557
    %575 = vmatmul.bf16.gmra.mxu0 %v562
    %v576 = vpop.f32.mrf.mxu0
    %v577 = vadd.f32 0.0, %v576
    %v578 = vpop.f32.mrf.mxu0
    %v579 = vadd.f32 0.0, %v578
    %580 = vmatmul.bf16.gmra.mxu0 %v565
    %v581 = vpop.f32.mrf.mxu0
    %v582 = vadd.f32 0.0, %v581
    %v583 = vpop.f32.mrf.mxu0
    %584 = vdwg.mxu0
    %v585 = vpack.c.bf16 %v579, %v577
    %v586 = vpack.c.bf16 %v582, %v582
    %v588 = vsel %vm504, %v586, 0
    %590 = vmatpush.bf16.msra.mxu0 0
    %591 = vmatpush.bf16.msra.mxu0 0
    %592 = vmatpush.bf16.msra.mxu0 0
    %593 = vmatpush.bf16.msra.mxu0 0
    %594 = vmatpush.bf16.msra.mxu0 0
    %595 = vmatpush.bf16.msra.mxu0 0
    %596 = vmatpush.bf16.msra.mxu0 %v588
    %597 = vmatpush.bf16.msra.mxu0 %v585
    %598 = vmatmul.bf16.gmra.mxu0 %v499
    %v599 = vpop.f32.mrf.mxu0
    %v600 = vadd.f32 0.0, %v599
    %v601 = vpop.f32.mrf.mxu0
    %v602 = vadd.f32 0.0, %v601
    %603 = vmatmul.bf16.gmra.mxu0 %v502
    %v604 = vpop.f32.mrf.mxu0
    %v605 = vadd.f32 0.0, %v604
    %v606 = vpop.f32.mrf.mxu0
    %607 = vdwg.mxu0
    %v609 = vperm.slane %v547, 0
    %v611 = vmul.f32 %v600, %v609
    %v612 = vmul.f32 %v602, %v609
    %v613 = vmul.f32 %v605, %v609
    %v615 = vperm.slane %v548, 0
    %v617 = vadd.f32 %v611, %v615
    %v618 = vadd.f32 %v612, %v615
    %v619 = vadd.f32 %v613, %v615
    %v620 = vmax.f32 %v617, 0.0
    %v621 = vmax.f32 %v618, 0.0
    %v622 = vmax.f32 %v619, 0.0
    %v623 = vpack.c.bf16 %v621, %v620
    %v624 = vpack.c.bf16 %v622, %v622
    %v625 = vld [vmem:[#allocation17] sm:$0xf]
    %v626 = vld [vmem:[#allocation17 + $0x4] sm:$0xf]
    %v627 = vld [vmem:[#allocation17 + $0x8] sm:$0xf]
    %v628 = vld [vmem:[#allocation17 + $0xc] sm:$0xf]
    %v629 = vld [vmem:[%s27] sm:$0xf]
    %v630 = vld [vmem:[%s27 + $0x4] sm:$0xf]
    %v631 = vld [vmem:[%s27 + $0x8] sm:$0xf]
    %v632 = vld [vmem:[%s27 + $0xc] sm:$0xf]
    %v633 = vld [vmem:[#allocation19] sm:$0x1]
    %v634 = vld [vmem:[#allocation20] sm:$0x1]
    %v638 = vunpack.c.l.b16 %v387
    %v639 = vunpack.c.l.b16 %v388
    %v640 = vunpack.c.l.b16 %v389
    %v641 = vpack.c.b16 %v639, %v638
    %v642 = vpack.c.b16 %v640, %v640
    %v644 = vsel %vm497, %v641, 0
    %v647 = vsel %vm497, %v642, 0
    %v649 = vsel %vm504, %v443, 0
    %651 = vmatpush.bf16.msra.mxu0 0
    %652 = vmatpush.bf16.msra.mxu0 0
    %653 = vmatpush.bf16.msra.mxu0 0
    %654 = vmatpush.bf16.msra.mxu0 0
    %655 = vmatpush.bf16.msra.mxu0 0
    %656 = vmatpush.bf16.msra.mxu0 0
    %657 = vmatpush.bf16.msra.mxu0 %v649
    %658 = vmatpush.bf16.msra.mxu0 %v442
    %659 = vmatmul.bf16.gmra.mxu0 %v644
    %v660 = vpop.f32.mrf.mxu0
    %v661 = vadd.f32 0.0, %v660
    %v662 = vpop.f32.mrf.mxu0
    %v663 = vadd.f32 0.0, %v662
    %664 = vmatmul.bf16.gmra.mxu0 %v647
    %v665 = vpop.f32.mrf.mxu0
    %v666 = vadd.f32 0.0, %v665
    %v667 = vpop.f32.mrf.mxu0
    %668 = vdwg.mxu0
    %v669 = vpack.c.bf16 %v663, %v661
    %v670 = vpack.c.bf16 %v666, %v666
    %v675 = vunpack.c.l.b16 %v629
    %v676 = vunpack.c.l.b16 %v630
    %v677 = vunpack.c.l.b16 %v631
    %v678 = vunpack.c.l.b16 %v632
    %v679 = vpack.c.b16 %v676, %v675
    %v680 = vpack.c.b16 %v678, %v677
    %683 = vmatpush.bf16.msra.mxu0 0
    %684 = vmatpush.bf16.msra.mxu0 0
    %685 = vmatpush.bf16.msra.mxu0 0
    %686 = vmatpush.bf16.msra.mxu0 0
    %687 = vmatpush.bf16.msra.mxu0 0
    %688 = vmatpush.bf16.msra.mxu0 0
    %689 = vmatpush.bf16.msra.mxu0 %v680
    %690 = vmatpush.bf16.msra.mxu0 %v679
    %691 = vmatmul.bf16.gmra.mxu0 %v464
    %v692 = vpop.f32.mrf.mxu0
    %v693 = vadd.f32 0.0, %v692
    %v694 = vpop.f32.mrf.mxu0
    %v695 = vadd.f32 0.0, %v694
    %696 = vmatmul.bf16.gmra.mxu0 %v467
    %v697 = vpop.f32.mrf.mxu0
    %v698 = vadd.f32 0.0, %v697
    %v699 = vpop.f32.mrf.mxu0
    %700 = vdwg.mxu0
    %v705 = vunpack.c.l.b16 %v625
    %v706 = vunpack.c.l.b16 %v626
    %v707 = vunpack.c.l.b16 %v627
    %v708 = vunpack.c.l.b16 %v628
    %v709 = vpack.c.b16 %v706, %v705
    %v710 = vpack.c.b16 %v708, %v707
    %v714 = vsel %vm462, %v669, 0
    %v717 = vsel %vm462, %v670, 0
    %719 = vmatpush.bf16.msra.mxu0 0
    %720 = vmatpush.bf16.msra.mxu0 0
    %721 = vmatpush.bf16.msra.mxu0 0
    %722 = vmatpush.bf16.msra.mxu0 0
    %723 = vmatpush.bf16.msra.mxu0 0
    %724 = vmatpush.bf16.msra.mxu0 0
    %725 = vmatpush.bf16.msra.mxu0 %v710
    %726 = vmatpush.bf16.msra.mxu0 %v709
    %727 = vmatmul.bf16.gmra.mxu0 %v714
    %v728 = vpop.f32.mrf.mxu0
    %v729 = vadd.f32 %v693, %v728
    %v730 = vpop.f32.mrf.mxu0
    %v731 = vadd.f32 %v695, %v730
    %732 = vmatmul.bf16.gmra.mxu0 %v717
    %v733 = vpop.f32.mrf.mxu0
    %v734 = vadd.f32 %v698, %v733
    %v735 = vpop.f32.mrf.mxu0
    %736 = vdwg.mxu0
    %v738 = vperm.slane %v633, 0
    %v740 = vmul.f32 %v729, %v738
    %v741 = vmul.f32 %v731, %v738
    %v742 = vmul.f32 %v734, %v738
    %v744 = vperm.slane %v634, 0
    %v746 = vadd.f32 %v740, %v744
    %v747 = vadd.f32 %v741, %v744
    %v748 = vadd.f32 %v742, %v744
    %v749 = vmax.f32 %v746, 0.0
    %v750 = vmax.f32 %v747, 0.0
    %v751 = vmax.f32 %v748, 0.0
    %v752 = vpack.c.bf16 %v750, %v749
    %v753 = vpack.c.bf16 %v751, %v751
    %v754 = vld [vmem:[#allocation22] sm:$0xf]
    %v755 = vld [vmem:[#allocation22 + $0x4] sm:$0xf]
    %v756 = vld [vmem:[#allocation22 + $0x8] sm:$0xf]
    %v757 = vld [vmem:[#allocation22 + $0xc] sm:$0xf]
    %v758 = vld [vmem:[#allocation23] sm:$0xf]
    %v759 = vld [vmem:[#allocation23 + $0x4] sm:$0xf]
    %v760 = vld [vmem:[#allocation23 + $0x8] sm:$0xf]
    %v761 = vld [vmem:[#allocation23 + $0xc] sm:$0xf]
    %v762 = vld [vmem:[#allocation25] sm:$0x1]
    %v763 = vld [vmem:[#allocation26] sm:$0x1]
    %v765 = vsel %vm504, %v753, 0
    %767 = vmatpush.bf16.msra.mxu0 0
    %768 = vmatpush.bf16.msra.mxu0 0
    %769 = vmatpush.bf16.msra.mxu0 0
    %770 = vmatpush.bf16.msra.mxu0 0
    %771 = vmatpush.bf16.msra.mxu0 0
    %772 = vmatpush.bf16.msra.mxu0 0
    %773 = vmatpush.bf16.msra.mxu0 %v765
    %774 = vmatpush.bf16.msra.mxu0 %v752
    %775 = vmatmul.bf16.gmra.mxu0 %v644
    %v776 = vpop.f32.mrf.mxu0
    %v777 = vadd.f32 0.0, %v776
    %v778 = vpop.f32.mrf.mxu0
    %v779 = vadd.f32 0.0, %v778
    %780 = vmatmul.bf16.gmra.mxu0 %v647
    %v781 = vpop.f32.mrf.mxu0
    %v782 = vadd.f32 0.0, %v781
    %v783 = vpop.f32.mrf.mxu0
    %784 = vdwg.mxu0
    %v785 = vpack.c.bf16 %v779, %v777
    %v786 = vpack.c.bf16 %v782, %v782
    %v791 = vunpack.c.l.b16 %v758
    %v792 = vunpack.c.l.b16 %v759
    %v793 = vunpack.c.l.b16 %v760
    %v794 = vunpack.c.l.b16 %v761
    %v795 = vpack.c.b16 %v792, %v791
    %v796 = vpack.c.b16 %v794, %v793
    %v800 = vsel %vm462, %v752, 0
    %v802 = vsel %vm462, %v753, 0
    %804 = vmatpush.bf16.msra.mxu0 0
    %805 = vmatpush.bf16.msra.mxu0 0
    %806 = vmatpush.bf16.msra.mxu0 0
    %807 = vmatpush.bf16.msra.mxu0 0
    %808 = vmatpush.bf16.msra.mxu0 0
    %809 = vmatpush.bf16.msra.mxu0 0
    %810 = vmatpush.bf16.msra.mxu0 %v796
    %811 = vmatpush.bf16.msra.mxu0 %v795
    %812 = vmatmul.bf16.gmra.mxu0 %v800
    %v813 = vpop.f32.mrf.mxu0
    %v814 = vadd.f32 0.0, %v813
    %v815 = vpop.f32.mrf.mxu0
    %v816 = vadd.f32 0.0, %v815
    %817 = vmatmul.bf16.gmra.mxu0 %v802
    %v818 = vpop.f32.mrf.mxu0
    %v819 = vadd.f32 0.0, %v818
    %v820 = vpop.f32.mrf.mxu0
    %821 = vdwg.mxu0
    %v826 = vunpack.c.l.b16 %v754
    %v827 = vunpack.c.l.b16 %v755
    %v828 = vunpack.c.l.b16 %v756
    %v829 = vunpack.c.l.b16 %v757
    %v830 = vpack.c.b16 %v827, %v826
    %v831 = vpack.c.b16 %v829, %v828
    %v835 = vsel %vm462, %v785, 0
    %v838 = vsel %vm462, %v786, 0
    %840 = vmatpush.bf16.msra.mxu0 0
    %841 = vmatpush.bf16.msra.mxu0 0
    %842 = vmatpush.bf16.msra.mxu0 0
    %843 = vmatpush.bf16.msra.mxu0 0
    %844 = vmatpush.bf16.msra.mxu0 0
    %845 = vmatpush.bf16.msra.mxu0 0
    %846 = vmatpush.bf16.msra.mxu0 %v831
    %847 = vmatpush.bf16.msra.mxu0 %v830
    %848 = vmatmul.bf16.gmra.mxu0 %v835
    %v849 = vpop.f32.mrf.mxu0
    %v850 = vadd.f32 %v814, %v849
    %v851 = vpop.f32.mrf.mxu0
    %v852 = vadd.f32 %v816, %v851
    %853 = vmatmul.bf16.gmra.mxu0 %v838
    %v854 = vpop.f32.mrf.mxu0
    %v855 = vadd.f32 %v819, %v854
    %v856 = vpop.f32.mrf.mxu0
    %857 = vdwg.mxu0
    %v859 = vperm.slane %v762, 0
    %v861 = vmul.f32 %v850, %v859
    %v862 = vmul.f32 %v852, %v859
    %v863 = vmul.f32 %v855, %v859
    %v865 = vperm.slane %v763, 0
    %v867 = vadd.f32 %v861, %v865
    %v868 = vadd.f32 %v862, %v865
    %v869 = vadd.f32 %v863, %v865
    %v870 = vmax.f32 %v867, 0.0
    %v871 = vmax.f32 %v868, 0.0
    %v872 = vmax.f32 %v869, 0.0
    %v873 = vpack.c.bf16 %v871, %v870
    %v874 = vpack.c.bf16 %v872, %v872
    %v876 = vsel %vm497, %v390, 0
    %v879 = vsel %vm504, %v624, 0
    %881 = vmatpush.bf16.msra.mxu0 0
    %882 = vmatpush.bf16.msra.mxu0 0
    %883 = vmatpush.bf16.msra.mxu0 0
    %884 = vmatpush.bf16.msra.mxu0 0
    %885 = vmatpush.bf16.msra.mxu0 0
    %886 = vmatpush.bf16.msra.mxu0 0
    %887 = vmatpush.bf16.msra.mxu0 %v879
    %888 = vmatpush.bf16.msra.mxu0 %v623
    %889 = vmatmul.bf16.gmra.mxu0 %v876
    %v890 = vpop.f32.mrf.mxu0
    %v891 = vadd.f32 0.0, %v890
    %v892 = vpop.f32.mrf.mxu0
    %893 = vdwg.mxu0
    %v894 = vpack.c.bf16 %v891, %v891
    %v896 = vsel %vm504, %v874, 0
    %898 = vmatpush.bf16.msra.mxu0 0
    %899 = vmatpush.bf16.msra.mxu0 0
    %900 = vmatpush.bf16.msra.mxu0 0
    %901 = vmatpush.bf16.msra.mxu0 0
    %902 = vmatpush.bf16.msra.mxu0 0
    %903 = vmatpush.bf16.msra.mxu0 0
    %904 = vmatpush.bf16.msra.mxu0 %v896
    %905 = vmatpush.bf16.msra.mxu0 %v873
    %906 = vmatmul.bf16.gmra.mxu0 %v876
    %v907 = vpop.f32.mrf.mxu0
    %v908 = vadd.f32 0.0, %v907
    %v909 = vpop.f32.mrf.mxu0
    %910 = vdwg.mxu0
    %v911 = vpack.c.bf16 %v908, %v908
    %v912 = vld [vmem:[#allocation28] sm:$0xf]
    %v913 = vld [vmem:[#allocation28 + $0x4] sm:$0xf]
    %v914 = vld [vmem:[#allocation28 + $0x8] sm:$0xf]
    %v915 = vld [vmem:[#allocation28 + $0xc] sm:$0xf]
    %v916 = vld [vmem:[#allocation29] sm:$0xf]
    %v917 = vld [vmem:[#allocation29 + $0x4] sm:$0xf]
    %v918 = vld [vmem:[#allocation29 + $0x8] sm:$0xf]
    %v919 = vld [vmem:[#allocation29 + $0xc] sm:$0xf]
    %v920 = vld [vmem:[%s45] sm:$0x1]
    %v921 = vld [vmem:[%s47] sm:$0x1]
    %v926 = vunpack.c.l.b16 %v916
    %v927 = vunpack.c.l.b16 %v917
    %v928 = vunpack.c.l.b16 %v918
    %v929 = vunpack.c.l.b16 %v919
    %v930 = vpack.c.b16 %v927, %v926
    %v931 = vpack.c.b16 %v929, %v928
    %v935 = vsel %vm462, %v911, 0
    %937 = vmatpush.bf16.msra.mxu0 0
    %938 = vmatpush.bf16.msra.mxu0 0
    %939 = vmatpush.bf16.msra.mxu0 0
    %940 = vmatpush.bf16.msra.mxu0 0
    %941 = vmatpush.bf16.msra.mxu0 0
    %942 = vmatpush.bf16.msra.mxu0 0
    %943 = vmatpush.bf16.msra.mxu0 %v931
    %944 = vmatpush.bf16.msra.mxu0 %v930
    %945 = vmatmul.bf16.gmra.mxu0 %v935
    %v946 = vpop.f32.mrf.mxu0
    %v947 = vadd.f32 0.0, %v946
    %v948 = vpop.f32.mrf.mxu0
    %949 = vdwg.mxu0
    %v954 = vunpack.c.l.b16 %v912
    %v955 = vunpack.c.l.b16 %v913
    %v956 = vunpack.c.l.b16 %v914
    %v957 = vunpack.c.l.b16 %v915
    %v958 = vpack.c.b16 %v955, %v954
    %v959 = vpack.c.b16 %v957, %v956
    %v963 = vsel %vm462, %v894, 0
    %965 = vmatpush.bf16.msra.mxu0 0
    %966 = vmatpush.bf16.msra.mxu0 0
    %967 = vmatpush.bf16.msra.mxu0 0
    %968 = vmatpush.bf16.msra.mxu0 0
    %969 = vmatpush.bf16.msra.mxu0 0
    %970 = vmatpush.bf16.msra.mxu0 0
    %971 = vmatpush.bf16.msra.mxu0 %v959
    %972 = vmatpush.bf16.msra.mxu0 %v958
    %973 = vmatmul.bf16.gmra.mxu0 %v963
    %v974 = vpop.f32.mrf.mxu0
    %v975 = vadd.f32 %v947, %v974
    %v976 = vpop.f32.mrf.mxu0
    %977 = vdwg.mxu0
    %v979 = vperm.slane %v920, 0
    %v981 = vmul.f32 %v975, %v979
    %v983 = vperm.slane %v921, 0
    %v985 = vadd.f32 %v981, %v983
    %v986 = vmax.f32 %v985, 0.0
    %v987 = vpack.c.bf16 %v986, %v986
    %v988 = vld [vmem:[%s49] sm:$0xf]
    %v989 = vld [vmem:[%s49 + $0x4] sm:$0xf]
    %v990 = vld [vmem:[%s49 + $0x8] sm:$0xf]
    %v991 = vld [vmem:[%s49 + $0xc] sm:$0xf]
    %v992 = vld [vmem:[%s51] sm:$0x1]
    %v993 = vld [vmem:[%s53] sm:$0x1]
    %v998 = vunpack.c.l.b16 %v988
    %v999 = vunpack.c.l.b16 %v989
    %v1000 = vunpack.c.l.b16 %v990
    %v1001 = vunpack.c.l.b16 %v991
    %v1002 = vpack.c.b16 %v999, %v998
    %v1003 = vpack.c.b16 %v1001, %v1000
    %v1007 = vsel %vm462, %v987, 0
    %1009 = vmatpush.bf16.msra.mxu0 0
    %1010 = vmatpush.bf16.msra.mxu0 0
    %1011 = vmatpush.bf16.msra.mxu0 0
    %1012 = vmatpush.bf16.msra.mxu0 0
    %1013 = vmatpush.bf16.msra.mxu0 0
    %1014 = vmatpush.bf16.msra.mxu0 0
    %1015 = vmatpush.bf16.msra.mxu0 %v1003
    %1016 = vmatpush.bf16.msra.mxu0 %v1002
    %1017 = vmatmul.bf16.gmra.mxu0 %v1007
    %v1018 = vpop.f32.mrf.mxu0
    %v1019 = vadd.f32 0.0, %v1018
    %v1020 = vpop.f32.mrf.mxu0
    %1021 = vdwg.mxu0
    %v1023 = vperm.slane %v992, 0
    %v1025 = vmul.f32 %v1019, %v1023
    %v1027 = vperm.slane %v993, 0
    %v1029 = vadd.f32 %v1025, %v1027
    %v1030 = vmax.f32 %v1029, 0.0
    %v1031 = vpack.c.bf16 %v1030, %v1030
    %v1032 = vld [vmem:[%s55] sm:$0xf]
    %v1033 = vld [vmem:[%s55 + $0x4] sm:$0xf]
    %v1034 = vld [vmem:[%s57] sm:$0x1]
    %v1036 = vperm.slane %v1034, 0
    %v1040 = vunpack.c.l.b16 %v1032
    %v1041 = vunpack.c.l.b16 %v1033
    %v1042 = vpack.c.b16 %v1041, %v1040
    %v1045 = vsel %vm414, %v1031, 0
    %1047 = vmatpush.bf16.msra.mxu0 0
    %1048 = vmatpush.bf16.msra.mxu0 0
    %1049 = vmatpush.bf16.msra.mxu0 0
    %1050 = vmatpush.bf16.msra.mxu0 0
    %1051 = vmatpush.bf16.msra.mxu0 0
    %1052 = vmatpush.bf16.msra.mxu0 0
    %1053 = vmatpush.bf16.msra.mxu0 0
    %1054 = vmatpush.bf16.msra.mxu0 %v1042
    %1055 = vmatmul.bf16.gmra.mxu0 %v1045
    %v1056 = vpop.f32.mrf.mxu0
    %v1057 = vadd.f32 %v1036, %v1056
    %v1058 = vpop.f32.mrf.mxu0
    %1059 = vdwg.mxu0
    %1060 = vst [vmem:[#allocation31] sm:$0xff] %v1057
    // Predicated region
    $region190: #{tpu_custom_call.1} parent=1 // pred_check
      _
    $region191: #{tpu_custom_call.1} parent=1 // pred_check_branch
      %1062 = sbr.rel (0) target = $region193
    $region192: #{tpu_custom_call.1} parent=1 // pred_region
      %1064 = vsyncadd [#allocation4], 0
      %s1066 = sshll.u32 [#allocation31], 4
      %s1067 = int_to_ptr.vmem [resolvable:$true] %s1066
      %s1068 = sshll.u32 %s59, 4
      %s1069 = int_to_ptr.hbm [resolvable:$true] %s1068
      %1071 = dma.vmem_to_hbm [thread:$0]  %s1067, 128, %s1069, [#allocation4]
    $region193: #{tpu_custom_call.1} parent=1 // pred_fallthru
      _
    // Predicated region
    $region194: #{tpu_custom_call.1} parent=1 // pred_check
      _
    $region195: #{tpu_custom_call.1} parent=1 // pred_check_branch
      %1073 = sbr.rel (0) target = $region197
    $region196: #{tpu_custom_call.1} parent=1 // pred_region
      %1075 = dma.done [#allocation4], 128
    $region197: #{tpu_custom_call.1} parent=1 // pred_fallthru
      _
    %1076 = vsyncpa [#allocation3], 1
    %1077 = vsyncpa [#allocation6], 1
    %1078 = vsyncpa [#allocation9], 1
    %1079 = vsyncpa [#allocation12], 1
    %1080 = vsyncpa [#allocation15], 1
    %1081 = vsyncpa [#allocation18], 1
    %1082 = vsyncpa [#allocation21], 1
    %1083 = vsyncpa [#allocation24], 1
    %1084 = vsyncpa [#allocation27], 1
    %1085 = vsyncpa [#allocation30], 1
    %1086 = vsyncpa [#allocation4], 1

</llo_original>
